<compile_context>
chip_gen: v7x
topology: tpu7x:2x2x1
jax: 0.10.0
libtpu: 0.0.40
codegen_flags: <defaults>
</compile_context>

<pallas_src>
from functools import partial

import jax
import jax.numpy as jnp
from jax.experimental import pallas as pl
from jax.experimental.pallas import tpu as pltpu

EPS = 1e-5                    # nn.LayerNorm default
APPROX_SOFTMAX_RECIP = True   # EUP reciprocal for softmax denom (~2^-12 rel. err);
                              # set False for exact torch.nn.functional.softmax semantics.


def _layernorm(x, gamma, beta):
    # float32 statistics, biased variance (matches torch.nn.LayerNorm)
    mean = jnp.mean(x, axis=-1, keepdims=True)
    var = jnp.mean((x - mean) ** 2, axis=-1, keepdims=True)
    return (x - mean) * jax.lax.rsqrt(var + EPS) * gamma + beta


# --------------------- fused (attention + FFN) x depth kernel ---------------------
def vit_stack_kernel(x_ref, g1_ref, be1_ref, wqkv_ref, wo_ref, bo_ref,
                     g2_ref, be2_ref, w1_ref, b1_ref, w2_ref, b2_ref,
                     o_ref, *, heads, dim_head):
    """One (batch-element, layer) grid step of the fused PreNorm transformer."""
    layer = pl.program_id(1)
    inner = heads * dim_head
    scale = dim_head ** (-0.5)

    # The residual stream lives in the depth-invariant output block: seed it from
    # the HBM input at layer 0, then it stays resident in VMEM across the depth loop.
    @pl.when(layer == 0)
    def _():
        o_ref[...] = x_ref[...]

    x = o_ref[...]                                          # (N, D) float32 residual

    # ---------------- PreNorm(Attention) + residual ----------------
    xn = _layernorm(x, g1_ref[...], be1_ref[...]).astype(jnp.bfloat16)
    # single lane-dense QKV projection: (N, D) @ (D, 3*inner) -> (N, 3*inner), f32 acc
    qkv = jnp.dot(xn, wqkv_ref[...], preferred_element_type=jnp.float32)
    q = (qkv[:, 0 * inner:1 * inner] * scale).astype(jnp.bfloat16)   # scale folded into q
    k = qkv[:, 1 * inner:2 * inner].astype(jnp.bfloat16)
    v = qkv[:, 2 * inner:3 * inner].astype(jnp.bfloat16)

    # per-head attention core (static unroll; score tiles are tiny at this N)
    ctx_heads = []
    for h in range(heads):
        lo, hi = h * dim_head, (h + 1) * dim_head
        qh, kh, vh = q[:, lo:hi], k[:, lo:hi], v[:, lo:hi]            # (N, dh) bf16
        dots = jnp.einsum("ne,me->nm", qh, kh,
                          preferred_element_type=jnp.float32)         # (N, N) f32
        dots = dots - jnp.max(dots, axis=-1, keepdims=True)
        p = jnp.exp(dots)
        denom = jnp.sum(p, axis=-1, keepdims=True)
        if APPROX_SOFTMAX_RECIP:
            attn = p * pl.reciprocal(denom, approx=True)
        else:
            attn = p / denom
        ctx_heads.append(jnp.dot(attn.astype(jnp.bfloat16), vh,
                                 preferred_element_type=jnp.float32))  # (N, dh) f32
    ctx = jnp.concatenate(ctx_heads, axis=-1).astype(jnp.bfloat16)     # (N, inner)

    # single output projection; the head reduction is inside the MXU contraction
    y = jnp.dot(ctx, wo_ref[...], preferred_element_type=jnp.float32) + bo_ref[...]
    x = x + y                                                          # residual (f32)

    # ---------------- PreNorm(FeedForward) + residual ----------------
    xn2 = _layernorm(x, g2_ref[...], be2_ref[...]).astype(jnp.bfloat16)
    hid = jnp.dot(xn2, w1_ref[...], preferred_element_type=jnp.float32) + b1_ref[...]
    hid = jnp.maximum(hid, 0.0).astype(jnp.bfloat16)                   # ReLU
    y2 = jnp.dot(hid, w2_ref[...], preferred_element_type=jnp.float32) + b2_ref[...]

    o_ref[...] = (x + y2).astype(o_ref.dtype)                          # residual (f32)


def _vmem_limit_bytes(n_tok, d_model, heads, dim_head, mlp_dim):
    bf16, f32 = 2, 4
    inner = heads * dim_head

    def padded(rows, cols):                 # (8, 128) layout padding of a 2-D buffer
        return (-(-rows // 8) * 8) * (-(-cols // 128) * 128)

    # pipeline blocks (double-buffered by the default BlockSpec pipeline)
    blocks = (padded(n_tok, d_model) * f32 * 2                                   # x in + out
              + (padded(d_model, 3 * inner) + padded(inner, d_model)
                 + padded(d_model, mlp_dim) + padded(mlp_dim, d_model)) * bf16   # weights
              + (6 * padded(1, d_model) + padded(1, mlp_dim)) * f32)             # vectors
    # in-kernel temporaries (layout-padded)
    temps = (2 * padded(n_tok, d_model) * (f32 + bf16)                  # xn, xn2
             + padded(n_tok, 3 * inner) * (f32 + bf16)                  # qkv, q/k/v
             + heads * (3 * padded(n_tok, n_tok)
                        + 2 * padded(n_tok, dim_head)) * f32            # scores / ctx_h
             + padded(n_tok, inner) * (f32 + bf16)                      # ctx
             + padded(n_tok, mlp_dim) * (f32 + bf16)                    # hidden
             + 4 * padded(n_tok, d_model) * f32)                        # y, residuals
    need = 2 * blocks + temps + (8 << 20)                               # + headroom

    try:   # cap at 3/4 of physical VMEM: ~48 MiB on v7x, ~96 MiB on v5e/v6e
        cap = getattr(pltpu.get_tpu_info(), "vmem_capacity_bytes", 64 << 20)
    except Exception:
        cap = 64 << 20
    ceiling = (cap * 3) // 4
    return int(min(max(need, 32 << 20), ceiling))


def transformer_forward(x, params, *, heads, dim_head):
    B, N, D = x.shape
    depth = params["wqkv"].shape[0]
    mlp_dim = params["w1"].shape[-1]
    inner = heads * dim_head
    kern = partial(vit_stack_kernel, heads=heads, dim_head=dim_head)

    def per_layer(shape):                       # per-layer weight block, indexed by l
        return pl.BlockSpec((None,) + shape, lambda b, l: (l, 0, 0))

    return pl.pallas_call(
        kern,
        out_shape=jax.ShapeDtypeStruct((B, N, D), x.dtype),
        grid_spec=pltpu.PrefetchScalarGridSpec(
            num_scalar_prefetch=0,
            grid=(B, depth),                    # depth innermost: residual stays in VMEM
            in_specs=[
                pl.BlockSpec((None, N, D), lambda b, l: (b, 0, 0)),   # x (read at layer 0)
                per_layer((1, D)),              # ln1 gamma
                per_layer((1, D)),              # ln1 beta
                per_layer((D, 3 * inner)),      # wqkv
                per_layer((inner, D)),          # wo
                per_layer((1, D)),              # bo
                per_layer((1, D)),              # ln2 gamma
                per_layer((1, D)),              # ln2 beta
                per_layer((D, mlp_dim)),        # w1
                per_layer((1, mlp_dim)),        # b1
                per_layer((mlp_dim, D)),        # w2
                per_layer((1, D)),              # b2
            ],
            out_specs=pl.BlockSpec((None, N, D), lambda b, l: (b, 0, 0)),
        ),
        input_output_aliases={0: 0},            # in-place residual stream
        compiler_params=pltpu.CompilerParams(
            dimension_semantics=("parallel", "arbitrary"),
            vmem_limit_bytes=_vmem_limit_bytes(N, D, heads, dim_head, mlp_dim),
        ),
    )(x, params["ln1_g"], params["ln1_b"], params["wqkv"], params["wo"], params["bo"],
      params["ln2_g"], params["ln2_b"], params["w1"], params["b1"], params["w2"], params["b2"])


# ------------------------------- parameters -------------------------------
def init_transformer_params(key, dim, depth, heads, dim_head, mlp_dim):
    inner = heads * dim_head
    ks = jax.random.split(key, 5)
    return {
        # PreNorm + Attention: fused QKV weight (D, 3*inner), columns laid out as
        # [Q_h0..Q_h{H-1} | K_h0.. | V_h0..] so per-head slices are contiguous.
        "ln1_g": jnp.ones((depth, 1, dim), jnp.float32),
        "ln1_b": jnp.zeros((depth, 1, dim), jnp.float32),
        "wqkv": (0.02 * jax.random.normal(ks[0], (depth, dim, 3 * inner))).astype(jnp.bfloat16),
        "wo": (0.02 * jax.random.normal(ks[1], (depth, inner, dim))).astype(jnp.bfloat16),
        "bo": (0.01 * jax.random.normal(ks[2], (depth, 1, dim))).astype(jnp.float32),
        # PreNorm + FeedForward
        "ln2_g": jnp.ones((depth, 1, dim), jnp.float32),
        "ln2_b": jnp.zeros((depth, 1, dim), jnp.float32),
        "w1": (0.02 * jax.random.normal(ks[3], (depth, dim, mlp_dim))).astype(jnp.bfloat16),
        "b1": jnp.zeros((depth, 1, mlp_dim), jnp.float32),
        "w2": (0.02 * jax.random.normal(ks[4], (depth, mlp_dim, dim))).astype(jnp.bfloat16),
        "b2": jnp.zeros((depth, 1, dim), jnp.float32),
    }


# ---------------------- pure-JAX reference (for check) ----------------------
def _ref_forward(x, params, *, heads, dim_head):
    depth = params["wqkv"].shape[0]
    inner = heads * dim_head
    scale = dim_head ** (-0.5)
    B, N, _ = x.shape

    def ln(z, g, b):
        m = jnp.mean(z, -1, keepdims=True)
        v = jnp.mean((z - m) ** 2, -1, keepdims=True)
        return (z - m) * jax.lax.rsqrt(v + EPS) * g + b

    for l in range(depth):
        xn = ln(x, params["ln1_g"][l], params["ln1_b"][l])
        qkv = xn @ params["wqkv"][l].astype(jnp.float32)               # (B, N, 3*inner)
        q, k, v = jnp.split(qkv, 3, axis=-1)
        q = q.reshape(B, N, heads, dim_head).transpose(0, 2, 1, 3) * scale
        k = k.reshape(B, N, heads, dim_head).transpose(0, 2, 1, 3)
        v = v.reshape(B, N, heads, dim_head).transpose(0, 2, 1, 3)
        attn = jax.nn.softmax(jnp.einsum("bhne,bhme->bhnm", q, k), axis=-1)
        ctx = jnp.einsum("bhnm,bhme->bhne", attn, v)
        ctx = ctx.transpose(0, 2, 1, 3).reshape(B, N, inner)
        x = x + ctx @ params["wo"][l].astype(jnp.float32) + params["bo"][l]

        xn2 = ln(x, params["ln2_g"][l], params["ln2_b"][l])
        h = jnp.maximum(xn2 @ params["w1"][l].astype(jnp.float32) + params["b1"][l], 0.0)
        x = x + h @ params["w2"][l].astype(jnp.float32) + params["b2"][l]
    return x


if __name__ == "__main__":
    # small ViT-like config (lane-dense: D = 128, inner = heads*dim_head = 128)
    dim, depth, heads, dim_head, mlp_dim = 128, 2, 4, 32, 256
    B, N = 2, 16

    key = jax.random.PRNGKey(0)
    kx, kp = jax.random.split(key)
    x = jax.random.normal(kx, (B, N, dim), jnp.float32)
    params = init_transformer_params(kp, dim, depth, heads, dim_head, mlp_dim)

    fwd = jax.jit(partial(transformer_forward, heads=heads, dim_head=dim_head))
    out = jax.block_until_ready(fwd(x, params))

    ref = _ref_forward(x, params, heads=heads, dim_head=dim_head)
    assert out.shape == (B, N, dim)
    max_err = float(jnp.max(jnp.abs(out - ref)))
    assert jnp.allclose(out, ref, rtol=1e-2, atol=1e-2), f"mismatch vs reference (max_err={max_err})"

    print("KERNEL_OK")
</pallas_src>

<mosaic_0001>
module attributes {stable_mosaic.version = 11 : i64} {
  func.func @vit_stack_kernel(%arg0: i32, %arg1: i32, %arg2: memref<1x16x128xf32, #tpu.memory_space<vmem>>, %arg3: memref<1x1x128xf32, #tpu.memory_space<vmem>>, %arg4: memref<1x1x128xf32, #tpu.memory_space<vmem>>, %arg5: memref<1x128x384xbf16, #tpu.memory_space<vmem>>, %arg6: memref<1x128x128xbf16, #tpu.memory_space<vmem>>, %arg7: memref<1x1x128xf32, #tpu.memory_space<vmem>>, %arg8: memref<1x1x128xf32, #tpu.memory_space<vmem>>, %arg9: memref<1x1x128xf32, #tpu.memory_space<vmem>>, %arg10: memref<1x128x256xbf16, #tpu.memory_space<vmem>>, %arg11: memref<1x1x256xf32, #tpu.memory_space<vmem>>, %arg12: memref<1x256x128xbf16, #tpu.memory_space<vmem>>, %arg13: memref<1x1x128xf32, #tpu.memory_space<vmem>>, %arg14: memref<1x16x128xf32, #tpu.memory_space<vmem>>) attributes {dimension_semantics = [#tpu.dimension_semantics<parallel>, #tpu.dimension_semantics<arbitrary>], iteration_bounds = array<i64: 2, 2>, scalar_prefetch = 0 : i64, scratch_operands = 0 : i64, tpu.core_type = #tpu.core_type<tc>, window_params = [{transform_indices = @transform_0, window_bounds = array<i64: 1, 16, 128>}, {transform_indices = @transform_1, window_bounds = array<i64: 1, 1, 128>}, {transform_indices = @transform_2, window_bounds = array<i64: 1, 1, 128>}, {transform_indices = @transform_3, window_bounds = array<i64: 1, 128, 384>}, {transform_indices = @transform_4, window_bounds = array<i64: 1, 128, 128>}, {transform_indices = @transform_5, window_bounds = array<i64: 1, 1, 128>}, {transform_indices = @transform_6, window_bounds = array<i64: 1, 1, 128>}, {transform_indices = @transform_7, window_bounds = array<i64: 1, 1, 128>}, {transform_indices = @transform_8, window_bounds = array<i64: 1, 128, 256>}, {transform_indices = @transform_9, window_bounds = array<i64: 1, 1, 256>}, {transform_indices = @transform_10, window_bounds = array<i64: 1, 256, 128>}, {transform_indices = @transform_11, window_bounds = array<i64: 1, 1, 128>}, {transform_indices = @transform_12, window_bounds = array<i64: 1, 16, 128>}]} {
    %c0_i32 = arith.constant 0 : i32
    %0 = arith.cmpi eq, %arg1, %c0_i32 : i32
    %1 = arith.extui %0 : i1 to i32
    %c0_i32_0 = arith.constant 0 : i32
    %2 = arith.cmpi ne, %1, %c0_i32_0 : i32
    scf.if %2 {
      %c0_70 = arith.constant 0 : index
      %c0_71 = arith.constant 0 : index
      %c0_72 = arith.constant 0 : index
      %165 = vector.load %arg2[%c0_70, %c0_71, %c0_72] : memref<1x16x128xf32, #tpu.memory_space<vmem>>, vector<1x16x128xf32>
      %166 = vector.shape_cast %165 : vector<1x16x128xf32> to vector<16x128xf32>
      %c0_73 = arith.constant 0 : index
      %c0_74 = arith.constant 0 : index
      %c0_75 = arith.constant 0 : index
      %167 = vector.load %arg14[%c0_73, %c0_74, %c0_75] : memref<1x16x128xf32, #tpu.memory_space<vmem>>, vector<1x16x128xf32>
      %168 = vector.shape_cast %167 : vector<1x16x128xf32> to vector<16x128xf32>
      %169 = vector.shape_cast %166 : vector<16x128xf32> to vector<1x16x128xf32>
      tpu.vector_store %arg14[%c0_73, %c0_74, %c0_75], %169 {strides = array<i32>} : memref<1x16x128xf32, #tpu.memory_space<vmem>>, vector<1x16x128xf32>,
    } else {
    }
    %c0 = arith.constant 0 : index
    %c0_1 = arith.constant 0 : index
    %c0_2 = arith.constant 0 : index
    %3 = vector.load %arg14[%c0, %c0_1, %c0_2] : memref<1x16x128xf32, #tpu.memory_space<vmem>>, vector<1x16x128xf32>
    %4 = vector.shape_cast %3 : vector<1x16x128xf32> to vector<16x128xf32>
    %c0_3 = arith.constant 0 : index
    %c0_4 = arith.constant 0 : index
    %c0_5 = arith.constant 0 : index
    %5 = vector.load %arg3[%c0_3, %c0_4, %c0_5] : memref<1x1x128xf32, #tpu.memory_space<vmem>>, vector<1x1x128xf32>
    %6 = vector.shape_cast %5 : vector<1x1x128xf32> to vector<1x128xf32>
    %c0_6 = arith.constant 0 : index
    %c0_7 = arith.constant 0 : index
    %c0_8 = arith.constant 0 : index
    %7 = vector.load %arg4[%c0_6, %c0_7, %c0_8] : memref<1x1x128xf32, #tpu.memory_space<vmem>>, vector<1x1x128xf32>
    %8 = vector.shape_cast %7 : vector<1x1x128xf32> to vector<1x128xf32>
    %cst = arith.constant dense<0.000000e+00> : vector<16xf32>
    %9 = vector.multi_reduction <add>, %4, %cst [1] : vector<16x128xf32> to vector<16xf32>
    %10 = vector.shape_cast %9 : vector<16xf32> to vector<16x1xf32>
    %cst_9 = arith.constant 1.280000e+02 : f32
    %11 = vector.broadcast %cst_9 : f32 to vector<16x1xf32>
    %12 = arith.divf %10, %11 : vector<16x1xf32>
    %13 = vector.broadcast %12 : vector<16x1xf32> to vector<16x128xf32>
    %14 = arith.subf %4, %13 : vector<16x128xf32>
    %15 = arith.mulf %14, %14 : vector<16x128xf32>
    %cst_10 = arith.constant dense<0.000000e+00> : vector<16xf32>
    %16 = vector.multi_reduction <add>, %15, %cst_10 [1] : vector<16x128xf32> to vector<16xf32>
    %17 = vector.shape_cast %16 : vector<16xf32> to vector<16x1xf32>
    %cst_11 = arith.constant 1.280000e+02 : f32
    %18 = vector.broadcast %cst_11 : f32 to vector<16x1xf32>
    %19 = arith.divf %17, %18 : vector<16x1xf32>
    %20 = vector.broadcast %12 : vector<16x1xf32> to vector<16x128xf32>
    %21 = arith.subf %4, %20 : vector<16x128xf32>
    %cst_12 = arith.constant 9.99999974E-6 : f32
    %22 = vector.broadcast %cst_12 : f32 to vector<16x1xf32>
    %23 = arith.addf %19, %22 : vector<16x1xf32>
    %24 = math.rsqrt %23 : vector<16x1xf32>
    %25 = vector.broadcast %24 : vector<16x1xf32> to vector<16x128xf32>
    %26 = arith.mulf %21, %25 : vector<16x128xf32>
    %27 = vector.broadcast %6 : vector<1x128xf32> to vector<16x128xf32>
    %28 = arith.mulf %26, %27 : vector<16x128xf32>
    %29 = vector.broadcast %8 : vector<1x128xf32> to vector<16x128xf32>
    %30 = arith.addf %28, %29 : vector<16x128xf32>
    %31 = arith.truncf %30 : vector<16x128xf32> to vector<16x128xbf16>
    %c0_13 = arith.constant 0 : index
    %c0_14 = arith.constant 0 : index
    %c0_15 = arith.constant 0 : index
    %32 = vector.load %arg5[%c0_13, %c0_14, %c0_15] : memref<1x128x384xbf16, #tpu.memory_space<vmem>>, vector<1x128x384xbf16>
    %33 = vector.shape_cast %32 : vector<1x128x384xbf16> to vector<128x384xbf16>
    %cst_16 = arith.constant dense<0.000000e+00> : vector<16x384xf32>
    %34 = tpu.matmul %31, %33, %cst_16 {dimension_numbers = #tpu.dot_dimension_numbers<[1], [0], [0], [1], [0, 0, 1, 1], [], []>} : vector<16x128xbf16>, vector<128x384xbf16>, vector<16x384xf32> -> vector<16x384xf32>
    %35 = vector.extract_strided_slice %34 {offsets = [0, 0], sizes = [16, 128], strides = [1, 1]} : vector<16x384xf32> to vector<16x128xf32>
    %cst_17 = arith.constant 0.176776692 : f32
    %36 = vector.broadcast %cst_17 : f32 to vector<16x128xf32>
    %37 = arith.mulf %35, %36 : vector<16x128xf32>
    %38 = arith.truncf %37 : vector<16x128xf32> to vector<16x128xbf16>
    %39 = vector.extract_strided_slice %34 {offsets = [0, 128], sizes = [16, 128], strides = [1, 1]} : vector<16x384xf32> to vector<16x128xf32>
    %40 = arith.truncf %39 : vector<16x128xf32> to vector<16x128xbf16>
    %41 = vector.extract_strided_slice %34 {offsets = [0, 256], sizes = [16, 128], strides = [1, 1]} : vector<16x384xf32> to vector<16x128xf32>
    %42 = arith.truncf %41 : vector<16x128xf32> to vector<16x128xbf16>
    %43 = vector.extract_strided_slice %38 {offsets = [0, 0], sizes = [16, 32], strides = [1, 1]} : vector<16x128xbf16> to vector<16x32xbf16>
    %44 = vector.extract_strided_slice %40 {offsets = [0, 0], sizes = [16, 32], strides = [1, 1]} : vector<16x128xbf16> to vector<16x32xbf16>
    %45 = vector.extract_strided_slice %42 {offsets = [0, 0], sizes = [16, 32], strides = [1, 1]} : vector<16x128xbf16> to vector<16x32xbf16>
    "tpu.trace_start"() <{level = 10 : i32, message = "ne,me->nm"}> : () -> ()
    %cst_18 = arith.constant dense<0.000000e+00> : vector<16x16xf32>
    %46 = tpu.matmul %43, %44, %cst_18 {dimension_numbers = #tpu.dot_dimension_numbers<[1], [1], [0], [0], [0, 0, 1, 0], [], []>} : vector<16x32xbf16>, vector<16x32xbf16>, vector<16x16xf32> -> vector<16x16xf32>
    "tpu.trace_stop"() : () -> ()
    %cst_19 = arith.constant dense<0xFF800000> : vector<16xf32>
    %47 = vector.multi_reduction <maximumf>, %46, %cst_19 [1] : vector<16x16xf32> to vector<16xf32>
    %48 = vector.shape_cast %47 : vector<16xf32> to vector<16x1xf32>
    %49 = vector.broadcast %48 : vector<16x1xf32> to vector<16x16xf32>
    %50 = arith.subf %46, %49 : vector<16x16xf32>
    %51 = math.exp %50 : vector<16x16xf32>
    %cst_20 = arith.constant dense<0.000000e+00> : vector<16xf32>
    %52 = vector.multi_reduction <add>, %51, %cst_20 [1] : vector<16x16xf32> to vector<16xf32>
    %53 = vector.shape_cast %52 : vector<16xf32> to vector<16x1xf32>
    %54 = tpu.reciprocal %53 {approx = true} : vector<16x1xf32> -> vector<16x1xf32>
    %55 = vector.broadcast %54 : vector<16x1xf32> to vector<16x16xf32>
    %56 = arith.mulf %51, %55 : vector<16x16xf32>
    %57 = arith.truncf %56 : vector<16x16xf32> to vector<16x16xbf16>
    %cst_21 = arith.constant dense<0.000000e+00> : vector<16x32xf32>
    %58 = tpu.matmul %57, %45, %cst_21 {dimension_numbers = #tpu.dot_dimension_numbers<[1], [0], [0], [1], [0, 0, 1, 1], [], []>} : vector<16x16xbf16>, vector<16x32xbf16>, vector<16x32xf32> -> vector<16x32xf32>
    %59 = vector.extract_strided_slice %38 {offsets = [0, 32], sizes = [16, 32], strides = [1, 1]} : vector<16x128xbf16> to vector<16x32xbf16>
    %60 = vector.extract_strided_slice %40 {offsets = [0, 32], sizes = [16, 32], strides = [1, 1]} : vector<16x128xbf16> to vector<16x32xbf16>
    %61 = vector.extract_strided_slice %42 {offsets = [0, 32], sizes = [16, 32], strides = [1, 1]} : vector<16x128xbf16> to vector<16x32xbf16>
    "tpu.trace_start"() <{level = 10 : i32, message = "ne,me->nm"}> : () -> ()
    %cst_22 = arith.constant dense<0.000000e+00> : vector<16x16xf32>
    %62 = tpu.matmul %59, %60, %cst_22 {dimension_numbers = #tpu.dot_dimension_numbers<[1], [1], [0], [0], [0, 0, 1, 0], [], []>} : vector<16x32xbf16>, vector<16x32xbf16>, vector<16x16xf32> -> vector<16x16xf32>
    "tpu.trace_stop"() : () -> ()
    %cst_23 = arith.constant dense<0xFF800000> : vector<16xf32>
    %63 = vector.multi_reduction <maximumf>, %62, %cst_23 [1] : vector<16x16xf32> to vector<16xf32>
    %64 = vector.shape_cast %63 : vector<16xf32> to vector<16x1xf32>
    %65 = vector.broadcast %64 : vector<16x1xf32> to vector<16x16xf32>
    %66 = arith.subf %62, %65 : vector<16x16xf32>
    %67 = math.exp %66 : vector<16x16xf32>
    %cst_24 = arith.constant dense<0.000000e+00> : vector<16xf32>
    %68 = vector.multi_reduction <add>, %67, %cst_24 [1] : vector<16x16xf32> to vector<16xf32>
    %69 = vector.shape_cast %68 : vector<16xf32> to vector<16x1xf32>
    %70 = tpu.reciprocal %69 {approx = true} : vector<16x1xf32> -> vector<16x1xf32>
    %71 = vector.broadcast %70 : vector<16x1xf32> to vector<16x16xf32>
    %72 = arith.mulf %67, %71 : vector<16x16xf32>
    %73 = arith.truncf %72 : vector<16x16xf32> to vector<16x16xbf16>
    %cst_25 = arith.constant dense<0.000000e+00> : vector<16x32xf32>
    %74 = tpu.matmul %73, %61, %cst_25 {dimension_numbers = #tpu.dot_dimension_numbers<[1], [0], [0], [1], [0, 0, 1, 1], [], []>} : vector<16x16xbf16>, vector<16x32xbf16>, vector<16x32xf32> -> vector<16x32xf32>
    %75 = vector.extract_strided_slice %38 {offsets = [0, 64], sizes = [16, 32], strides = [1, 1]} : vector<16x128xbf16> to vector<16x32xbf16>
    %76 = vector.extract_strided_slice %40 {offsets = [0, 64], sizes = [16, 32], strides = [1, 1]} : vector<16x128xbf16> to vector<16x32xbf16>
    %77 = vector.extract_strided_slice %42 {offsets = [0, 64], sizes = [16, 32], strides = [1, 1]} : vector<16x128xbf16> to vector<16x32xbf16>
    "tpu.trace_start"() <{level = 10 : i32, message = "ne,me->nm"}> : () -> ()
    %cst_26 = arith.constant dense<0.000000e+00> : vector<16x16xf32>
    %78 = tpu.matmul %75, %76, %cst_26 {dimension_numbers = #tpu.dot_dimension_numbers<[1], [1], [0], [0], [0, 0, 1, 0], [], []>} : vector<16x32xbf16>, vector<16x32xbf16>, vector<16x16xf32> -> vector<16x16xf32>
    "tpu.trace_stop"() : () -> ()
    %cst_27 = arith.constant dense<0xFF800000> : vector<16xf32>
    %79 = vector.multi_reduction <maximumf>, %78, %cst_27 [1] : vector<16x16xf32> to vector<16xf32>
    %80 = vector.shape_cast %79 : vector<16xf32> to vector<16x1xf32>
    %81 = vector.broadcast %80 : vector<16x1xf32> to vector<16x16xf32>
    %82 = arith.subf %78, %81 : vector<16x16xf32>
    %83 = math.exp %82 : vector<16x16xf32>
    %cst_28 = arith.constant dense<0.000000e+00> : vector<16xf32>
    %84 = vector.multi_reduction <add>, %83, %cst_28 [1] : vector<16x16xf32> to vector<16xf32>
    %85 = vector.shape_cast %84 : vector<16xf32> to vector<16x1xf32>
    %86 = tpu.reciprocal %85 {approx = true} : vector<16x1xf32> -> vector<16x1xf32>
    %87 = vector.broadcast %86 : vector<16x1xf32> to vector<16x16xf32>
    %88 = arith.mulf %83, %87 : vector<16x16xf32>
    %89 = arith.truncf %88 : vector<16x16xf32> to vector<16x16xbf16>
    %cst_29 = arith.constant dense<0.000000e+00> : vector<16x32xf32>
    %90 = tpu.matmul %89, %77, %cst_29 {dimension_numbers = #tpu.dot_dimension_numbers<[1], [0], [0], [1], [0, 0, 1, 1], [], []>} : vector<16x16xbf16>, vector<16x32xbf16>, vector<16x32xf32> -> vector<16x32xf32>
    %91 = vector.extract_strided_slice %38 {offsets = [0, 96], sizes = [16, 32], strides = [1, 1]} : vector<16x128xbf16> to vector<16x32xbf16>
    %92 = vector.extract_strided_slice %40 {offsets = [0, 96], sizes = [16, 32], strides = [1, 1]} : vector<16x128xbf16> to vector<16x32xbf16>
    %93 = vector.extract_strided_slice %42 {offsets = [0, 96], sizes = [16, 32], strides = [1, 1]} : vector<16x128xbf16> to vector<16x32xbf16>
    "tpu.trace_start"() <{level = 10 : i32, message = "ne,me->nm"}> : () -> ()
    %cst_30 = arith.constant dense<0.000000e+00> : vector<16x16xf32>
    %94 = tpu.matmul %91, %92, %cst_30 {dimension_numbers = #tpu.dot_dimension_numbers<[1], [1], [0], [0], [0, 0, 1, 0], [], []>} : vector<16x32xbf16>, vector<16x32xbf16>, vector<16x16xf32> -> vector<16x16xf32>
    "tpu.trace_stop"() : () -> ()
    %cst_31 = arith.constant dense<0xFF800000> : vector<16xf32>
    %95 = vector.multi_reduction <maximumf>, %94, %cst_31 [1] : vector<16x16xf32> to vector<16xf32>
    %96 = vector.shape_cast %95 : vector<16xf32> to vector<16x1xf32>
    %97 = vector.broadcast %96 : vector<16x1xf32> to vector<16x16xf32>
    %98 = arith.subf %94, %97 : vector<16x16xf32>
    %99 = math.exp %98 : vector<16x16xf32>
    %cst_32 = arith.constant dense<0.000000e+00> : vector<16xf32>
    %100 = vector.multi_reduction <add>, %99, %cst_32 [1] : vector<16x16xf32> to vector<16xf32>
    %101 = vector.shape_cast %100 : vector<16xf32> to vector<16x1xf32>
    %102 = tpu.reciprocal %101 {approx = true} : vector<16x1xf32> -> vector<16x1xf32>
    %103 = vector.broadcast %102 : vector<16x1xf32> to vector<16x16xf32>
    %104 = arith.mulf %99, %103 : vector<16x16xf32>
    %105 = arith.truncf %104 : vector<16x16xf32> to vector<16x16xbf16>
    %cst_33 = arith.constant dense<0.000000e+00> : vector<16x32xf32>
    %106 = tpu.matmul %105, %93, %cst_33 {dimension_numbers = #tpu.dot_dimension_numbers<[1], [0], [0], [1], [0, 0, 1, 1], [], []>} : vector<16x16xbf16>, vector<16x32xbf16>, vector<16x32xf32> -> vector<16x32xf32>
    %107 = tpu.concatenate %58, %74, %90, %106 in 1 : vector<16x32xf32>, vector<16x32xf32>, vector<16x32xf32>, vector<16x32xf32> -> vector<16x128xf32>
    %108 = arith.truncf %107 : vector<16x128xf32> to vector<16x128xbf16>
    %c0_34 = arith.constant 0 : index
    %c0_35 = arith.constant 0 : index
    %c0_36 = arith.constant 0 : index
    %109 = vector.load %arg6[%c0_34, %c0_35, %c0_36] : memref<1x128x128xbf16, #tpu.memory_space<vmem>>, vector<1x128x128xbf16>
    %110 = vector.shape_cast %109 : vector<1x128x128xbf16> to vector<128x128xbf16>
    %cst_37 = arith.constant dense<0.000000e+00> : vector<16x128xf32>
    %111 = tpu.matmul %108, %110, %cst_37 {dimension_numbers = #tpu.dot_dimension_numbers<[1], [0], [0], [1], [0, 0, 1, 1], [], []>} : vector<16x128xbf16>, vector<128x128xbf16>, vector<16x128xf32> -> vector<16x128xf32>
    %c0_38 = arith.constant 0 : index
    %c0_39 = arith.constant 0 : index
    %c0_40 = arith.constant 0 : index
    %112 = vector.load %arg7[%c0_38, %c0_39, %c0_40] : memref<1x1x128xf32, #tpu.memory_space<vmem>>, vector<1x1x128xf32>
    %113 = vector.shape_cast %112 : vector<1x1x128xf32> to vector<1x128xf32>
    %114 = vector.broadcast %113 : vector<1x128xf32> to vector<16x128xf32>
    %115 = arith.addf %111, %114 : vector<16x128xf32>
    %116 = arith.addf %4, %115 : vector<16x128xf32>
    %c0_41 = arith.constant 0 : index
    %c0_42 = arith.constant 0 : index
    %c0_43 = arith.constant 0 : index
    %117 = vector.load %arg8[%c0_41, %c0_42, %c0_43] : memref<1x1x128xf32, #tpu.memory_space<vmem>>, vector<1x1x128xf32>
    %118 = vector.shape_cast %117 : vector<1x1x128xf32> to vector<1x128xf32>
    %c0_44 = arith.constant 0 : index
    %c0_45 = arith.constant 0 : index
    %c0_46 = arith.constant 0 : index
    %119 = vector.load %arg9[%c0_44, %c0_45, %c0_46] : memref<1x1x128xf32, #tpu.memory_space<vmem>>, vector<1x1x128xf32>
    %120 = vector.shape_cast %119 : vector<1x1x128xf32> to vector<1x128xf32>
    %cst_47 = arith.constant dense<0.000000e+00> : vector<16xf32>
    %121 = vector.multi_reduction <add>, %116, %cst_47 [1] : vector<16x128xf32> to vector<16xf32>
    %122 = vector.shape_cast %121 : vector<16xf32> to vector<16x1xf32>
    %cst_48 = arith.constant 1.280000e+02 : f32
    %123 = vector.broadcast %cst_48 : f32 to vector<16x1xf32>
    %124 = arith.divf %122, %123 : vector<16x1xf32>
    %125 = vector.broadcast %124 : vector<16x1xf32> to vector<16x128xf32>
    %126 = arith.subf %116, %125 : vector<16x128xf32>
    %127 = arith.mulf %126, %126 : vector<16x128xf32>
    %cst_49 = arith.constant dense<0.000000e+00> : vector<16xf32>
    %128 = vector.multi_reduction <add>, %127, %cst_49 [1] : vector<16x128xf32> to vector<16xf32>
    %129 = vector.shape_cast %128 : vector<16xf32> to vector<16x1xf32>
    %cst_50 = arith.constant 1.280000e+02 : f32
    %130 = vector.broadcast %cst_50 : f32 to vector<16x1xf32>
    %131 = arith.divf %129, %130 : vector<16x1xf32>
    %132 = vector.broadcast %124 : vector<16x1xf32> to vector<16x128xf32>
    %133 = arith.subf %116, %132 : vector<16x128xf32>
    %cst_51 = arith.constant 9.99999974E-6 : f32
    %134 = vector.broadcast %cst_51 : f32 to vector<16x1xf32>
    %135 = arith.addf %131, %134 : vector<16x1xf32>
    %136 = math.rsqrt %135 : vector<16x1xf32>
    %137 = vector.broadcast %136 : vector<16x1xf32> to vector<16x128xf32>
    %138 = arith.mulf %133, %137 : vector<16x128xf32>
    %139 = vector.broadcast %118 : vector<1x128xf32> to vector<16x128xf32>
    %140 = arith.mulf %138, %139 : vector<16x128xf32>
    %141 = vector.broadcast %120 : vector<1x128xf32> to vector<16x128xf32>
    %142 = arith.addf %140, %141 : vector<16x128xf32>
    %143 = arith.truncf %142 : vector<16x128xf32> to vector<16x128xbf16>
    %c0_52 = arith.constant 0 : index
    %c0_53 = arith.constant 0 : index
    %c0_54 = arith.constant 0 : index
    %144 = vector.load %arg10[%c0_52, %c0_53, %c0_54] : memref<1x128x256xbf16, #tpu.memory_space<vmem>>, vector<1x128x256xbf16>
    %145 = vector.shape_cast %144 : vector<1x128x256xbf16> to vector<128x256xbf16>
    %cst_55 = arith.constant dense<0.000000e+00> : vector<16x256xf32>
    %146 = tpu.matmul %143, %145, %cst_55 {dimension_numbers = #tpu.dot_dimension_numbers<[1], [0], [0], [1], [0, 0, 1, 1], [], []>} : vector<16x128xbf16>, vector<128x256xbf16>, vector<16x256xf32> -> vector<16x256xf32>
    %c0_56 = arith.constant 0 : index
    %c0_57 = arith.constant 0 : index
    %c0_58 = arith.constant 0 : index
    %147 = vector.load %arg11[%c0_56, %c0_57, %c0_58] : memref<1x1x256xf32, #tpu.memory_space<vmem>>, vector<1x1x256xf32>
    %148 = vector.shape_cast %147 : vector<1x1x256xf32> to vector<1x256xf32>
    %149 = vector.broadcast %148 : vector<1x256xf32> to vector<16x256xf32>
    %150 = arith.addf %146, %149 : vector<16x256xf32>
    %cst_59 = arith.constant 0.000000e+00 : f32
    %151 = vector.broadcast %cst_59 : f32 to vector<16x256xf32>
    %152 = arith.maximumf %150, %151 : vector<16x256xf32>
    %153 = arith.truncf %152 : vector<16x256xf32> to vector<16x256xbf16>
    %c0_60 = arith.constant 0 : index
    %c0_61 = arith.constant 0 : index
    %c0_62 = arith.constant 0 : index
    %154 = vector.load %arg12[%c0_60, %c0_61, %c0_62] : memref<1x256x128xbf16, #tpu.memory_space<vmem>>, vector<1x256x128xbf16>
    %155 = vector.shape_cast %154 : vector<1x256x128xbf16> to vector<256x128xbf16>
    %cst_63 = arith.constant dense<0.000000e+00> : vector<16x128xf32>
    %156 = tpu.matmul %153, %155, %cst_63 {dimension_numbers = #tpu.dot_dimension_numbers<[1], [0], [0], [1], [0, 0, 1, 1], [], []>} : vector<16x256xbf16>, vector<256x128xbf16>, vector<16x128xf32> -> vector<16x128xf32>
    %c0_64 = arith.constant 0 : index
    %c0_65 = arith.constant 0 : index
    %c0_66 = arith.constant 0 : index
    %157 = vector.load %arg13[%c0_64, %c0_65, %c0_66] : memref<1x1x128xf32, #tpu.memory_space<vmem>>, vector<1x1x128xf32>
    %158 = vector.shape_cast %157 : vector<1x1x128xf32> to vector<1x128xf32>
    %159 = vector.broadcast %158 : vector<1x128xf32> to vector<16x128xf32>
    %160 = arith.addf %156, %159 : vector<16x128xf32>
    %161 = arith.addf %116, %160 : vector<16x128xf32>
    %c0_67 = arith.constant 0 : index
    %c0_68 = arith.constant 0 : index
    %c0_69 = arith.constant 0 : index
    %162 = vector.load %arg14[%c0_67, %c0_68, %c0_69] : memref<1x16x128xf32, #tpu.memory_space<vmem>>, vector<1x16x128xf32>
    %163 = vector.shape_cast %162 : vector<1x16x128xf32> to vector<16x128xf32>
    %164 = vector.shape_cast %161 : vector<16x128xf32> to vector<1x16x128xf32>
    tpu.vector_store %arg14[%c0_67, %c0_68, %c0_69], %164 {strides = array<i32>} : memref<1x16x128xf32, #tpu.memory_space<vmem>>, vector<1x16x128xf32>,
    return
  }
  func.func @transform_0(%arg0: i32, %arg1: i32) -> (i32, i32, i32) {
    %c0_i32 = arith.constant 0 : i32
    %c0_i32_0 = arith.constant 0 : i32
    %c0_i32_1 = arith.constant 0 : i32
    return %arg0, %c0_i32, %c0_i32_0 : i32, i32, i32
  }
  func.func @transform_1(%arg0: i32, %arg1: i32) -> (i32, i32, i32) {
    %c0_i32 = arith.constant 0 : i32
    %c0_i32_0 = arith.constant 0 : i32
    %c0_i32_1 = arith.constant 0 : i32
    return %arg1, %c0_i32, %c0_i32_0 : i32, i32, i32
  }
  func.func @transform_2(%arg0: i32, %arg1: i32) -> (i32, i32, i32) {
    %c0_i32 = arith.constant 0 : i32
    %c0_i32_0 = arith.constant 0 : i32
    %c0_i32_1 = arith.constant 0 : i32
    return %arg1, %c0_i32, %c0_i32_0 : i32, i32, i32
  }
  func.func @transform_3(%arg0: i32, %arg1: i32) -> (i32, i32, i32) {
    %c0_i32 = arith.constant 0 : i32
    %c0_i32_0 = arith.constant 0 : i32
    %c0_i32_1 = arith.constant 0 : i32
    return %arg1, %c0_i32, %c0_i32_0 : i32, i32, i32
  }
  func.func @transform_4(%arg0: i32, %arg1: i32) -> (i32, i32, i32) {
    %c0_i32 = arith.constant 0 : i32
    %c0_i32_0 = arith.constant 0 : i32
    %c0_i32_1 = arith.constant 0 : i32
    return %arg1, %c0_i32, %c0_i32_0 : i32, i32, i32
  }
  func.func @transform_5(%arg0: i32, %arg1: i32) -> (i32, i32, i32) {
    %c0_i32 = arith.constant 0 : i32
    %c0_i32_0 = arith.constant 0 : i32
    %c0_i32_1 = arith.constant 0 : i32
    return %arg1, %c0_i32, %c0_i32_0 : i32, i32, i32
  }
  func.func @transform_6(%arg0: i32, %arg1: i32) -> (i32, i32, i32) {
    %c0_i32 = arith.constant 0 : i32
    %c0_i32_0 = arith.constant 0 : i32
    %c0_i32_1 = arith.constant 0 : i32
    return %arg1, %c0_i32, %c0_i32_0 : i32, i32, i32
  }
  func.func @transform_7(%arg0: i32, %arg1: i32) -> (i32, i32, i32) {
    %c0_i32 = arith.constant 0 : i32
    %c0_i32_0 = arith.constant 0 : i32
    %c0_i32_1 = arith.constant 0 : i32
    return %arg1, %c0_i32, %c0_i32_0 : i32, i32, i32
  }
  func.func @transform_8(%arg0: i32, %arg1: i32) -> (i32, i32, i32) {
    %c0_i32 = arith.constant 0 : i32
    %c0_i32_0 = arith.constant 0 : i32
    %c0_i32_1 = arith.constant 0 : i32
    return %arg1, %c0_i32, %c0_i32_0 : i32, i32, i32
  }
  func.func @transform_9(%arg0: i32, %arg1: i32) -> (i32, i32, i32) {
    %c0_i32 = arith.constant 0 : i32
    %c0_i32_0 = arith.constant 0 : i32
    %c0_i32_1 = arith.constant 0 : i32
    return %arg1, %c0_i32, %c0_i32_0 : i32, i32, i32
  }
  func.func @transform_10(%arg0: i32, %arg1: i32) -> (i32, i32, i32) {
    %c0_i32 = arith.constant 0 : i32
    %c0_i32_0 = arith.constant 0 : i32
    %c0_i32_1 = arith.constant 0 : i32
    return %arg1, %c0_i32, %c0_i32_0 : i32, i32, i32
  }
  func.func @transform_11(%arg0: i32, %arg1: i32) -> (i32, i32, i32) {
    %c0_i32 = arith.constant 0 : i32
    %c0_i32_0 = arith.constant 0 : i32
    %c0_i32_1 = arith.constant 0 : i32
    return %arg1, %c0_i32, %c0_i32_0 : i32, i32, i32
  }
  func.func @transform_12(%arg0: i32, %arg1: i32) -> (i32, i32, i32) {
    %c0_i32 = arith.constant 0 : i32
    %c0_i32_0 = arith.constant 0 : i32
    %c0_i32_1 = arith.constant 0 : i32
    return %arg0, %c0_i32, %c0_i32_0 : i32, i32, i32
  }
}

</mosaic_0001>

<llo_original>
// kernel: transformer_forward.1
$region0: #{transformer_forward.1}
  #allocation0 [shape = 'u32[]', space=smem, size = 0x4, offset = 0x4, fixed_abs, tag = 'smem constant byte address 0x4 - core index']
  #allocation1 [shape = 'u32[144,128]{1,0:T(1,128)}', space=vmem, size = 0x12000, scoped, tag = 'internal scratch']
  %s0 = inlined_call_operand.hbm [shape: f32[2,16,128], index: 0, kind: input, shape index: {}, may-alias: {0,12}]
  %s1 = inlined_call_operand.vmem [shape: f32[2,1,128], index: 1, kind: input, shape index: {}]
  %s2 = inlined_call_operand.vmem [shape: f32[2,1,128], index: 2, kind: input, shape index: {}]
  %s3 = inlined_call_operand.hbm [shape: bf16[2,128,384], index: 3, kind: input, shape index: {}]
  %s4 = inlined_call_operand.hbm [shape: bf16[2,128,128], index: 4, kind: input, shape index: {}]
  %s5 = inlined_call_operand.vmem [shape: f32[2,1,128], index: 5, kind: input, shape index: {}]
  %s6 = inlined_call_operand.vmem [shape: f32[2,1,128], index: 6, kind: input, shape index: {}]
  %s7 = inlined_call_operand.vmem [shape: f32[2,1,128], index: 7, kind: input, shape index: {}]
  %s8 = inlined_call_operand.hbm [shape: bf16[2,128,256], index: 8, kind: input, shape index: {}]
  %s9 = inlined_call_operand.vmem [shape: f32[2,1,256], index: 9, kind: input, shape index: {}]
  %s10 = inlined_call_operand.hbm [shape: bf16[2,256,128], index: 10, kind: input, shape index: {}]
  %s11 = inlined_call_operand.vmem [shape: f32[2,1,128], index: 11, kind: input, shape index: {}]
  %s12 = inlined_call_operand.hbm [shape: f32[2,16,128], index: 12, kind: output, shape index: {}, may-alias: {0,12}]
  %s13 = sld [smem:[#allocation0]]
  $region105: #{transformer_forward.1} parent=0
    _
  %s15 = ssub.s32 1, %s13
  %s16 = scalar_select 0, %s15, %s13
  $region1: #{transformer_forward.1} parent=0
    #allocation2 [shape = 'u8[16384]{0}', space=vmem, size = 0x4000, scoped, tag = 'input window, operand 0']
    #allocation3 [shape = 's32[2]{0}', space=sflag, size = 0x8, scoped, tag = 'scoped memory for transformer_forward.1']
    #allocation4 [shape = 's32[2]{0}', space=sflag, size = 0x8, scoped, tag = 'scoped memory for transformer_forward.1']
    #allocation5 [shape = 'u8[196608]{0}', space=vmem, size = 0x30000, scoped, tag = 'input window, operand 3']
    #allocation6 [shape = 's32[2]{0}', space=sflag, size = 0x8, scoped, tag = 'scoped memory for transformer_forward.1']
    #allocation7 [shape = 'u8[65536]{0}', space=vmem, size = 0x10000, scoped, tag = 'input window, operand 4']
    #allocation8 [shape = 'u8[131072]{0}', space=vmem, size = 0x20000, scoped, tag = 'input window, operand 8']
    #allocation9 [shape = 's32[2]{0}', space=sflag, size = 0x8, scoped, tag = 'scoped memory for transformer_forward.1']
    #allocation10 [shape = 'u8[131072]{0}', space=vmem, size = 0x20000, scoped, tag = 'input window, operand 10']
    #allocation11 [shape = 'u8[16384]{0}', space=vmem, size = 0x4000, scoped, tag = 'output window, operand 0']
    %17 = vsyncpa [#allocation3], 0
    %s18 = scalar_lea.sflag [#allocation3], 1
    %19 = vsyncpa %s18, 0
    %20 = vsyncpa [#allocation6], 0
    %s21 = scalar_lea.sflag [#allocation6], 1
    %22 = vsyncpa %s21, 0
    %23 = vsyncpa [#allocation9], 0
    %s24 = scalar_lea.sflag [#allocation9], 1
    %25 = vsyncpa %s24, 0
    %26 = vsyncpa [#allocation4], 0
    %s27 = scalar_lea.sflag [#allocation4], 1
    %28 = vsyncpa %s27, 0
    loop: start=0, step=1, limit=6
    $region2: #{transformer_forward.1} parent=1 // loop_pre_header
      _
    $region3: #{transformer_forward.1} parent=1 // loop_header
      %s30 = sphi 0, %s34
      %p31 = scmp.ge.s32.totalorder %s30, 6
      %s37 = sphi 0, %s49
      %s38 = sphi 0, %s45
      %s39 = sphi 0, %s37
      %s40 = sphi 0, %s38
      %s41 = sphi 0, %s39
      %s42 = sphi 0, %s40
      %s52 = sphi 0, %s54
      %s55 = sphi 0, %s52
      %s56 = sphi 0, %s55
      %s72 = sphi 0, %s56
      %s78 = sphi 0, %s80
      %s81 = sphi 0, %s78
      %s82 = sphi 0, %s81
      %s98 = sphi 0, %s82
      %s104 = sphi 0, %s106
      %s107 = sphi 0, %s104
      %s108 = sphi 0, %s107
      %s124 = sphi 0, %s108
      %s130 = sphi 0, %s132
      %s133 = sphi 0, %s130
      %s134 = sphi 0, %s133
      %s150 = sphi 0, %s134
      %s156 = sphi 0, %s158
      %s159 = sphi 0, %s156
      %s160 = sphi 0, %s159
      %s176 = sphi 0, %s160
      %s182 = sphi 0, %s184
      %s185 = sphi 0, %s182
      %s186 = sphi 0, %s185
      %s202 = sphi 0, %s186
      %s208 = sphi 0, %s210
      %s211 = sphi 0, %s208
      %s212 = sphi 0, %s211
      %s228 = sphi 0, %s212
      %s234 = sphi 0, %s236
      %s237 = sphi 0, %s234
      %s238 = sphi 0, %s237
      %s254 = sphi 0, %s238
      %s260 = sphi 0, %s262
      %s263 = sphi 0, %s260
      %s264 = sphi 0, %s263
      %s280 = sphi 0, %s264
      %s286 = sphi 0, %s288
      %s289 = sphi 0, %s286
      %s290 = sphi 0, %s289
      %s306 = sphi 0, %s290
      %s312 = sphi 0, %s314
      %s315 = sphi 0, %s312
      %s316 = sphi 0, %s315
      %s332 = sphi 0, %s316
      %s338 = sphi 0, %s340
      %s341 = sphi 0, %s338
      %s342 = sphi 0, %s341
      %s358 = sphi 0, %s342
      %s364 = sphi 0, %s366
      %s367 = sphi 0, %s364
      %s368 = sphi 0, %s367
      %s384 = sphi 0, %s368
    $region4: #{transformer_forward.1} parent=1 // loop_header_branch
      %33 = sbr.rel (%p31) target = $region8
    $region5: #{transformer_forward.1} parent=1 // loop_body
      %s35 = ssub.s32 %s30, 1
      %s36 = ssub.s32 %s30, 2
      %s43 = sadd.s32 1, %s38
      %p44 = scmp.ge.s32.totalorder %s43, 2
      %s45 = scalar_select %p44, 0, %s43
      %s46 = sadd.s32 1, %s37
      %s47 = scalar_select %p44, %s46, %s37
      %p48 = scmp.ge.s32.totalorder %s47, 2
      %s49 = scalar_select %p48, 0, %s47
      %s50 = ssub.s32 %s37, %s49
      %p51 = scmp.eq.s32.totalorder %s50, 0
      %s53 = sadd.s32 %s52, 1
      %s54 = scalar_select %p51, %s52, %s53
      %p57 = pneg %p51
      %p58 = scmp.eq.s32.totalorder %s30, 3
      %p59 = por %p57, %p58
      %p60 = scmp.ne.s32.totalorder %s52, %s55
      %p61 = scmp.eq.s32.totalorder %s30, 0
      %p62 = por %p60, %p61
      %p63 = scmp.ne.s32.totalorder %s52, %s55
      %p64 = scmp.eq.s32.totalorder %s35, 3
      %p65 = por %p63, %p64
      %p66 = scmp.ne.s32.totalorder %s55, %s56
      %p67 = scmp.eq.s32.totalorder %s35, 0
      %p68 = por %p66, %p67
      %p69 = scmp.ne.s32.totalorder %s55, %s56
      %p70 = scmp.eq.s32.totalorder %s36, 3
      %p71 = por %p69, %p70
      %p73 = scmp.ne.s32.totalorder %s56, %s72
      %p74 = scmp.eq.s32.totalorder %s36, 0
      %p75 = por %p73, %p74
      %s76 = ssub.s32 %s38, %s45
      %p77 = scmp.eq.s32.totalorder %s76, 0
      %s79 = sadd.s32 %s78, 1
      %s80 = scalar_select %p77, %s78, %s79
      %p83 = pneg %p77
      %p84 = scmp.eq.s32.totalorder %s30, 3
      %p85 = por %p83, %p84
      %p86 = scmp.ne.s32.totalorder %s78, %s81
      %p87 = scmp.eq.s32.totalorder %s30, 0
      %p88 = por %p86, %p87
      %p89 = scmp.ne.s32.totalorder %s78, %s81
      %p90 = scmp.eq.s32.totalorder %s35, 3
      %p91 = por %p89, %p90
      %p92 = scmp.ne.s32.totalorder %s81, %s82
      %p93 = scmp.eq.s32.totalorder %s35, 0
      %p94 = por %p92, %p93
      %p95 = scmp.ne.s32.totalorder %s81, %s82
      %p96 = scmp.eq.s32.totalorder %s36, 3
      %p97 = por %p95, %p96
      %p99 = scmp.ne.s32.totalorder %s82, %s98
      %p100 = scmp.eq.s32.totalorder %s36, 0
      %p101 = por %p99, %p100
      %s102 = ssub.s32 %s38, %s45
      %p103 = scmp.eq.s32.totalorder %s102, 0
      %s105 = sadd.s32 %s104, 1
      %s106 = scalar_select %p103, %s104, %s105
      %p109 = pneg %p103
      %p110 = scmp.eq.s32.totalorder %s30, 3
      %p111 = por %p109, %p110
      %p112 = scmp.ne.s32.totalorder %s104, %s107
      %p113 = scmp.eq.s32.totalorder %s30, 0
      %p114 = por %p112, %p113
      %p115 = scmp.ne.s32.totalorder %s104, %s107
      %p116 = scmp.eq.s32.totalorder %s35, 3
      %p117 = por %p115, %p116
      %p118 = scmp.ne.s32.totalorder %s107, %s108
      %p119 = scmp.eq.s32.totalorder %s35, 0
      %p120 = por %p118, %p119
      %p121 = scmp.ne.s32.totalorder %s107, %s108
      %p122 = scmp.eq.s32.totalorder %s36, 3
      %p123 = por %p121, %p122
      %p125 = scmp.ne.s32.totalorder %s108, %s124
      %p126 = scmp.eq.s32.totalorder %s36, 0
      %p127 = por %p125, %p126
      %s128 = ssub.s32 %s38, %s45
      %p129 = scmp.eq.s32.totalorder %s128, 0
      %s131 = sadd.s32 %s130, 1
      %s132 = scalar_select %p129, %s130, %s131
      %p135 = pneg %p129
      %p136 = scmp.eq.s32.totalorder %s30, 3
      %p137 = por %p135, %p136
      %p138 = scmp.ne.s32.totalorder %s130, %s133
      %p139 = scmp.eq.s32.totalorder %s30, 0
      %p140 = por %p138, %p139
      %p141 = scmp.ne.s32.totalorder %s130, %s133
      %p142 = scmp.eq.s32.totalorder %s35, 3
      %p143 = por %p141, %p142
      %p144 = scmp.ne.s32.totalorder %s133, %s134
      %p145 = scmp.eq.s32.totalorder %s35, 0
      %p146 = por %p144, %p145
      %p147 = scmp.ne.s32.totalorder %s133, %s134
      %p148 = scmp.eq.s32.totalorder %s36, 3
      %p149 = por %p147, %p148
      %p151 = scmp.ne.s32.totalorder %s134, %s150
      %p152 = scmp.eq.s32.totalorder %s36, 0
      %p153 = por %p151, %p152
      %s154 = ssub.s32 %s38, %s45
      %p155 = scmp.eq.s32.totalorder %s154, 0
      %s157 = sadd.s32 %s156, 1
      %s158 = scalar_select %p155, %s156, %s157
      %p161 = pneg %p155
      %p162 = scmp.eq.s32.totalorder %s30, 3
      %p163 = por %p161, %p162
      %p164 = scmp.ne.s32.totalorder %s156, %s159
      %p165 = scmp.eq.s32.totalorder %s30, 0
      %p166 = por %p164, %p165
      %p167 = scmp.ne.s32.totalorder %s156, %s159
      %p168 = scmp.eq.s32.totalorder %s35, 3
      %p169 = por %p167, %p168
      %p170 = scmp.ne.s32.totalorder %s159, %s160
      %p171 = scmp.eq.s32.totalorder %s35, 0
      %p172 = por %p170, %p171
      %p173 = scmp.ne.s32.totalorder %s159, %s160
      %p174 = scmp.eq.s32.totalorder %s36, 3
      %p175 = por %p173, %p174
      %p177 = scmp.ne.s32.totalorder %s160, %s176
      %p178 = scmp.eq.s32.totalorder %s36, 0
      %p179 = por %p177, %p178
      %s180 = ssub.s32 %s38, %s45
      %p181 = scmp.eq.s32.totalorder %s180, 0
      %s183 = sadd.s32 %s182, 1
      %s184 = scalar_select %p181, %s182, %s183
      %p187 = pneg %p181
      %p188 = scmp.eq.s32.totalorder %s30, 3
      %p189 = por %p187, %p188
      %p190 = scmp.ne.s32.totalorder %s182, %s185
      %p191 = scmp.eq.s32.totalorder %s30, 0
      %p192 = por %p190, %p191
      %p193 = scmp.ne.s32.totalorder %s182, %s185
      %p194 = scmp.eq.s32.totalorder %s35, 3
      %p195 = por %p193, %p194
      %p196 = scmp.ne.s32.totalorder %s185, %s186
      %p197 = scmp.eq.s32.totalorder %s35, 0
      %p198 = por %p196, %p197
      %p199 = scmp.ne.s32.totalorder %s185, %s186
      %p200 = scmp.eq.s32.totalorder %s36, 3
      %p201 = por %p199, %p200
      %p203 = scmp.ne.s32.totalorder %s186, %s202
      %p204 = scmp.eq.s32.totalorder %s36, 0
      %p205 = por %p203, %p204
      %s206 = ssub.s32 %s38, %s45
      %p207 = scmp.eq.s32.totalorder %s206, 0
      %s209 = sadd.s32 %s208, 1
      %s210 = scalar_select %p207, %s208, %s209
      %p213 = pneg %p207
      %p214 = scmp.eq.s32.totalorder %s30, 3
      %p215 = por %p213, %p214
      %p216 = scmp.ne.s32.totalorder %s208, %s211
      %p217 = scmp.eq.s32.totalorder %s30, 0
      %p218 = por %p216, %p217
      %p219 = scmp.ne.s32.totalorder %s208, %s211
      %p220 = scmp.eq.s32.totalorder %s35, 3
      %p221 = por %p219, %p220
      %p222 = scmp.ne.s32.totalorder %s211, %s212
      %p223 = scmp.eq.s32.totalorder %s35, 0
      %p224 = por %p222, %p223
      %p225 = scmp.ne.s32.totalorder %s211, %s212
      %p226 = scmp.eq.s32.totalorder %s36, 3
      %p227 = por %p225, %p226
      %p229 = scmp.ne.s32.totalorder %s212, %s228
      %p230 = scmp.eq.s32.totalorder %s36, 0
      %p231 = por %p229, %p230
      %s232 = ssub.s32 %s38, %s45
      %p233 = scmp.eq.s32.totalorder %s232, 0
      %s235 = sadd.s32 %s234, 1
      %s236 = scalar_select %p233, %s234, %s235
      %p239 = pneg %p233
      %p240 = scmp.eq.s32.totalorder %s30, 3
      %p241 = por %p239, %p240
      %p242 = scmp.ne.s32.totalorder %s234, %s237
      %p243 = scmp.eq.s32.totalorder %s30, 0
      %p244 = por %p242, %p243
      %p245 = scmp.ne.s32.totalorder %s234, %s237
      %p246 = scmp.eq.s32.totalorder %s35, 3
      %p247 = por %p245, %p246
      %p248 = scmp.ne.s32.totalorder %s237, %s238
      %p249 = scmp.eq.s32.totalorder %s35, 0
      %p250 = por %p248, %p249
      %p251 = scmp.ne.s32.totalorder %s237, %s238
      %p252 = scmp.eq.s32.totalorder %s36, 3
      %p253 = por %p251, %p252
      %p255 = scmp.ne.s32.totalorder %s238, %s254
      %p256 = scmp.eq.s32.totalorder %s36, 0
      %p257 = por %p255, %p256
      %s258 = ssub.s32 %s38, %s45
      %p259 = scmp.eq.s32.totalorder %s258, 0
      %s261 = sadd.s32 %s260, 1
      %s262 = scalar_select %p259, %s260, %s261
      %p265 = pneg %p259
      %p266 = scmp.eq.s32.totalorder %s30, 3
      %p267 = por %p265, %p266
      %p268 = scmp.ne.s32.totalorder %s260, %s263
      %p269 = scmp.eq.s32.totalorder %s30, 0
      %p270 = por %p268, %p269
      %p271 = scmp.ne.s32.totalorder %s260, %s263
      %p272 = scmp.eq.s32.totalorder %s35, 3
      %p273 = por %p271, %p272
      %p274 = scmp.ne.s32.totalorder %s263, %s264
      %p275 = scmp.eq.s32.totalorder %s35, 0
      %p276 = por %p274, %p275
      %p277 = scmp.ne.s32.totalorder %s263, %s264
      %p278 = scmp.eq.s32.totalorder %s36, 3
      %p279 = por %p277, %p278
      %p281 = scmp.ne.s32.totalorder %s264, %s280
      %p282 = scmp.eq.s32.totalorder %s36, 0
      %p283 = por %p281, %p282
      %s284 = ssub.s32 %s38, %s45
      %p285 = scmp.eq.s32.totalorder %s284, 0
      %s287 = sadd.s32 %s286, 1
      %s288 = scalar_select %p285, %s286, %s287
      %p291 = pneg %p285
      %p292 = scmp.eq.s32.totalorder %s30, 3
      %p293 = por %p291, %p292
      %p294 = scmp.ne.s32.totalorder %s286, %s289
      %p295 = scmp.eq.s32.totalorder %s30, 0
      %p296 = por %p294, %p295
      %p297 = scmp.ne.s32.totalorder %s286, %s289
      %p298 = scmp.eq.s32.totalorder %s35, 3
      %p299 = por %p297, %p298
      %p300 = scmp.ne.s32.totalorder %s289, %s290
      %p301 = scmp.eq.s32.totalorder %s35, 0
      %p302 = por %p300, %p301
      %p303 = scmp.ne.s32.totalorder %s289, %s290
      %p304 = scmp.eq.s32.totalorder %s36, 3
      %p305 = por %p303, %p304
      %p307 = scmp.ne.s32.totalorder %s290, %s306
      %p308 = scmp.eq.s32.totalorder %s36, 0
      %p309 = por %p307, %p308
      %s310 = ssub.s32 %s38, %s45
      %p311 = scmp.eq.s32.totalorder %s310, 0
      %s313 = sadd.s32 %s312, 1
      %s314 = scalar_select %p311, %s312, %s313
      %p317 = pneg %p311
      %p318 = scmp.eq.s32.totalorder %s30, 3
      %p319 = por %p317, %p318
      %p320 = scmp.ne.s32.totalorder %s312, %s315
      %p321 = scmp.eq.s32.totalorder %s30, 0
      %p322 = por %p320, %p321
      %p323 = scmp.ne.s32.totalorder %s312, %s315
      %p324 = scmp.eq.s32.totalorder %s35, 3
      %p325 = por %p323, %p324
      %p326 = scmp.ne.s32.totalorder %s315, %s316
      %p327 = scmp.eq.s32.totalorder %s35, 0
      %p328 = por %p326, %p327
      %p329 = scmp.ne.s32.totalorder %s315, %s316
      %p330 = scmp.eq.s32.totalorder %s36, 3
      %p331 = por %p329, %p330
      %p333 = scmp.ne.s32.totalorder %s316, %s332
      %p334 = scmp.eq.s32.totalorder %s36, 0
      %p335 = por %p333, %p334
      %s336 = ssub.s32 %s38, %s45
      %p337 = scmp.eq.s32.totalorder %s336, 0
      %s339 = sadd.s32 %s338, 1
      %s340 = scalar_select %p337, %s338, %s339
      %p343 = pneg %p337
      %p344 = scmp.eq.s32.totalorder %s30, 3
      %p345 = por %p343, %p344
      %p346 = scmp.ne.s32.totalorder %s338, %s341
      %p347 = scmp.eq.s32.totalorder %s30, 0
      %p348 = por %p346, %p347
      %p349 = scmp.ne.s32.totalorder %s338, %s341
      %p350 = scmp.eq.s32.totalorder %s35, 3
      %p351 = por %p349, %p350
      %p352 = scmp.ne.s32.totalorder %s341, %s342
      %p353 = scmp.eq.s32.totalorder %s35, 0
      %p354 = por %p352, %p353
      %p355 = scmp.ne.s32.totalorder %s341, %s342
      %p356 = scmp.eq.s32.totalorder %s36, 3
      %p357 = por %p355, %p356
      %p359 = scmp.ne.s32.totalorder %s342, %s358
      %p360 = scmp.eq.s32.totalorder %s36, 0
      %p361 = por %p359, %p360
      %s362 = ssub.s32 %s37, %s49
      %p363 = scmp.eq.s32.totalorder %s362, 0
      %s365 = sadd.s32 %s364, 1
      %s366 = scalar_select %p363, %s364, %s365
      %p369 = pneg %p363
      %p370 = scmp.eq.s32.totalorder %s30, 3
      %p371 = por %p369, %p370
      %p372 = scmp.ne.s32.totalorder %s364, %s367
      %p373 = scmp.eq.s32.totalorder %s30, 0
      %p374 = por %p372, %p373
      %p375 = scmp.ne.s32.totalorder %s364, %s367
      %p376 = scmp.eq.s32.totalorder %s35, 3
      %p377 = por %p375, %p376
      %p378 = scmp.ne.s32.totalorder %s367, %s368
      %p379 = scmp.eq.s32.totalorder %s35, 0
      %p380 = por %p378, %p379
      %p381 = scmp.ne.s32.totalorder %s367, %s368
      %p382 = scmp.eq.s32.totalorder %s36, 3
      %p383 = por %p381, %p382
      %p385 = scmp.ne.s32.totalorder %s368, %s384
      %p386 = scmp.eq.s32.totalorder %s36, 0
      %p387 = por %p385, %p386
      %p388 = scmp.le.s32.totalorder 1, %s30
      %p389 = scmp.lt.s32.totalorder %s30, 5
      %p390 = pnand %p388, %p389
      %p391 = pneg %p390
      // Predicated region
      $region9: #{transformer_forward.1} parent=5 // pred_check
        _
      $region10: #{transformer_forward.1} parent=5 // pred_check_branch
        %393 = sbr.rel (%p390) target = $region12
      $region11: #{transformer_forward.1} parent=5 // pred_region
        %s394 = ssub.s32 %s30, 1
      $region12: #{transformer_forward.1} parent=5 // pred_fallthru
        _
      %p395 = scmp.lt.s32.totalorder %s30, 4
      // Predicated region
      $region13: #{transformer_forward.1} parent=5 // pred_check
        %p396 = pneg %p395
      $region14: #{transformer_forward.1} parent=5 // pred_check_branch
        %398 = sbr.rel (%p396) target = $region16
      $region15: #{transformer_forward.1} parent=5 // pred_region
        // Predicated region
        $region17: #{transformer_forward.1} parent=15 // pred_check
          %p399 = pneg %p62
        $region18: #{transformer_forward.1} parent=15 // pred_check_branch
          %401 = sbr.rel (%p399) target = $region20
        $region19: #{transformer_forward.1} parent=15 // pred_region
          %s402 = sand.u32 %s52, 1
          %s403 = scalar_lea.sflag [#allocation3], %s402
          %s404 = sand.u32 %s52, 1
          %s405 = smul.addr %s404, 16
          %s406 = scalar_lea.vmem [#allocation2], %s405
          %s408 = ssub.s32 256, 256
          %409 = vsyncadd %s403, %s408
          %s410 = smul.addr %s37, 2
          %s411 = smul.addr %s410, 128
          %s412 = scalar_lea.hbm %s0, %s411
          %s413 = sshll.u32 %s406, 4
          %s414 = int_to_ptr.vmem [resolvable:$true] %s413
          %419 = dma.hbm_to_vmem [thread:$0]  %s412, 256, %s414, %s403, 128, 128, 8
        $region20: #{transformer_forward.1} parent=15 // pred_fallthru
          _
        // Predicated region
        $region21: #{transformer_forward.1} parent=15 // pred_check
          %p420 = pneg %p88
        $region22: #{transformer_forward.1} parent=15 // pred_check_branch
          %422 = sbr.rel (%p420) target = $region24
        $region23: #{transformer_forward.1} parent=15 // pred_region
          %p423 = scmp.lt.s32.totalorder %s38, 1
          %s424 = scalar_select %p423, %s38, 1
          %s425 = scalar_lea.vmem %s1, %s424
        $region24: #{transformer_forward.1} parent=15 // pred_fallthru
          _
        // Predicated region
        $region25: #{transformer_forward.1} parent=15 // pred_check
          %p426 = pneg %p114
        $region26: #{transformer_forward.1} parent=15 // pred_check_branch
          %428 = sbr.rel (%p426) target = $region28
        $region27: #{transformer_forward.1} parent=15 // pred_region
          %p429 = scmp.lt.s32.totalorder %s38, 1
          %s430 = scalar_select %p429, %s38, 1
          %s431 = scalar_lea.vmem %s2, %s430
        $region28: #{transformer_forward.1} parent=15 // pred_fallthru
          _
        // Predicated region
        $region29: #{transformer_forward.1} parent=15 // pred_check
          %p432 = pneg %p140
        $region30: #{transformer_forward.1} parent=15 // pred_check_branch
          %434 = sbr.rel (%p432) target = $region32
        $region31: #{transformer_forward.1} parent=15 // pred_region
          %s435 = sand.u32 %s30, 1
          %s436 = scalar_lea.sflag [#allocation6], %s435
          %s437 = sand.u32 %s130, 1
          %s438 = smul.addr %s437, 192
          %s439 = scalar_lea.vmem [#allocation5], %s438
          %s441 = ssub.s32 3072, 3072
          %442 = vsyncadd %s436, %s441
          %s443 = smul.addr %s38, 48
          %s444 = smul.addr %s443, 64
          %s445 = scalar_lea.hbm %s3, %s444
          %s446 = sshll.u32 %s439, 4
          %s447 = int_to_ptr.vmem [resolvable:$true] %s446
          %452 = dma.hbm_to_vmem [thread:$0]  %s445, 3072, %s447, %s436, 192, 192, 12
        $region32: #{transformer_forward.1} parent=15 // pred_fallthru
          _
        // Predicated region
        $region33: #{transformer_forward.1} parent=15 // pred_check
          %p453 = pneg %p166
        $region34: #{transformer_forward.1} parent=15 // pred_check_branch
          %455 = sbr.rel (%p453) target = $region36
        $region35: #{transformer_forward.1} parent=15 // pred_region
          %s456 = sand.u32 %s30, 1
          %s457 = scalar_lea.sflag [#allocation6], %s456
          %s458 = sand.u32 %s156, 1
          %s459 = smul.addr %s458, 64
          %s460 = scalar_lea.vmem [#allocation7], %s459
          %s462 = ssub.s32 1024, 1024
          %463 = vsyncadd %s457, %s462
          %s464 = smul.addr %s38, 16
          %s465 = smul.addr %s464, 64
          %s466 = scalar_lea.hbm %s4, %s465
          %s467 = sshll.u32 %s460, 4
          %s468 = int_to_ptr.vmem [resolvable:$true] %s467
          %473 = dma.hbm_to_vmem [thread:$0]  %s466, 1024, %s468, %s457, 64, 64, 4
        $region36: #{transformer_forward.1} parent=15 // pred_fallthru
          _
        // Predicated region
        $region37: #{transformer_forward.1} parent=15 // pred_check
          %p474 = pneg %p192
        $region38: #{transformer_forward.1} parent=15 // pred_check_branch
          %476 = sbr.rel (%p474) target = $region40
        $region39: #{transformer_forward.1} parent=15 // pred_region
          %p477 = scmp.lt.s32.totalorder %s38, 1
          %s478 = scalar_select %p477, %s38, 1
          %s479 = scalar_lea.vmem %s5, %s478
        $region40: #{transformer_forward.1} parent=15 // pred_fallthru
          _
        // Predicated region
        $region41: #{transformer_forward.1} parent=15 // pred_check
          %p480 = pneg %p218
        $region42: #{transformer_forward.1} parent=15 // pred_check_branch
          %482 = sbr.rel (%p480) target = $region44
        $region43: #{transformer_forward.1} parent=15 // pred_region
          %p483 = scmp.lt.s32.totalorder %s38, 1
          %s484 = scalar_select %p483, %s38, 1
          %s485 = scalar_lea.vmem %s6, %s484
        $region44: #{transformer_forward.1} parent=15 // pred_fallthru
          _
        // Predicated region
        $region45: #{transformer_forward.1} parent=15 // pred_check
          %p486 = pneg %p244
        $region46: #{transformer_forward.1} parent=15 // pred_check_branch
          %488 = sbr.rel (%p486) target = $region48
        $region47: #{transformer_forward.1} parent=15 // pred_region
          %p489 = scmp.lt.s32.totalorder %s38, 1
          %s490 = scalar_select %p489, %s38, 1
          %s491 = scalar_lea.vmem %s7, %s490
        $region48: #{transformer_forward.1} parent=15 // pred_fallthru
          _
        // Predicated region
        $region49: #{transformer_forward.1} parent=15 // pred_check
          %p492 = pneg %p270
        $region50: #{transformer_forward.1} parent=15 // pred_check_branch
          %494 = sbr.rel (%p492) target = $region52
        $region51: #{transformer_forward.1} parent=15 // pred_region
          %s495 = sand.u32 %s30, 1
          %s496 = scalar_lea.sflag [#allocation9], %s495
          %s497 = sand.u32 %s260, 1
          %s498 = smul.addr %s497, 128
          %s499 = scalar_lea.vmem [#allocation8], %s498
          %s501 = ssub.s32 2048, 2048
          %502 = vsyncadd %s496, %s501
          %s503 = smul.addr %s38, 32
          %s504 = smul.addr %s503, 64
          %s505 = scalar_lea.hbm %s8, %s504
          %s506 = sshll.u32 %s499, 4
          %s507 = int_to_ptr.vmem [resolvable:$true] %s506
          %512 = dma.hbm_to_vmem [thread:$0]  %s505, 2048, %s507, %s496, 128, 128, 8
        $region52: #{transformer_forward.1} parent=15 // pred_fallthru
          _
        // Predicated region
        $region53: #{transformer_forward.1} parent=15 // pred_check
          %p513 = pneg %p296
        $region54: #{transformer_forward.1} parent=15 // pred_check_branch
          %515 = sbr.rel (%p513) target = $region56
        $region55: #{transformer_forward.1} parent=15 // pred_region
          %p516 = scmp.lt.s32.totalorder %s38, 1
          %s517 = scalar_select %p516, %s38, 1
          %s518 = smul.addr %s517, 2
          %s519 = scalar_lea.vmem %s9, %s518
        $region56: #{transformer_forward.1} parent=15 // pred_fallthru
          _
        // Predicated region
        $region57: #{transformer_forward.1} parent=15 // pred_check
          %p520 = pneg %p322
        $region58: #{transformer_forward.1} parent=15 // pred_check_branch
          %522 = sbr.rel (%p520) target = $region60
        $region59: #{transformer_forward.1} parent=15 // pred_region
          %s523 = sand.u32 %s30, 1
          %s524 = scalar_lea.sflag [#allocation9], %s523
          %s525 = sand.u32 %s312, 1
          %s526 = smul.addr %s525, 128
          %s527 = scalar_lea.vmem [#allocation10], %s526
          %s529 = ssub.s32 2048, 2048
          %530 = vsyncadd %s524, %s529
          %s531 = smul.addr %s38, 32
          %s532 = smul.addr %s531, 64
          %s533 = scalar_lea.hbm %s10, %s532
          %s534 = sshll.u32 %s527, 4
          %s535 = int_to_ptr.vmem [resolvable:$true] %s534
          %540 = dma.hbm_to_vmem [thread:$0]  %s533, 2048, %s535, %s524, 64, 64, 4
        $region60: #{transformer_forward.1} parent=15 // pred_fallthru
          _
        // Predicated region
        $region61: #{transformer_forward.1} parent=15 // pred_check
          %p541 = pneg %p348
        $region62: #{transformer_forward.1} parent=15 // pred_check_branch
          %543 = sbr.rel (%p541) target = $region64
        $region63: #{transformer_forward.1} parent=15 // pred_region
          %p544 = scmp.lt.s32.totalorder %s38, 1
          %s545 = scalar_select %p544, %s38, 1
          %s546 = scalar_lea.vmem %s11, %s545
        $region64: #{transformer_forward.1} parent=15 // pred_fallthru
          _
      $region16: #{transformer_forward.1} parent=5 // pred_fallthru
        _
      %p547 = scmp.le.s32.totalorder 1, %s30
      %p548 = scmp.lt.s32.totalorder %s30, 5
      %p549 = pnand %p547, %p548
      %p550 = pneg %p549
      // Predicated region
      $region65: #{transformer_forward.1} parent=5 // pred_check
        _
      $region66: #{transformer_forward.1} parent=5 // pred_check_branch
        %552 = sbr.rel (%p549) target = $region68
      $region67: #{transformer_forward.1} parent=5 // pred_region
        %s553 = ssub.s32 %s30, 1
        %s554 = sand.u32 %s55, 1
        %s555 = scalar_lea.sflag [#allocation3], %s554
        %s556 = sand.u32 %s55, 1
        %s557 = smul.addr %s556, 16
        %s558 = scalar_lea.vmem [#allocation2], %s557
        // Predicated region
        $region69: #{transformer_forward.1} parent=67 // pred_check
          %p559 = pneg %p68
        $region70: #{transformer_forward.1} parent=67 // pred_check_branch
          %561 = sbr.rel (%p559) target = $region72
        $region71: #{transformer_forward.1} parent=67 // pred_region
          %562 = dma.done %s555, 256
        $region72: #{transformer_forward.1} parent=67 // pred_fallthru
          _
        %s563 = sand.u32 %s35, 1
        %s564 = scalar_lea.sflag [#allocation6], %s563
        %s565 = sand.u32 %s133, 1
        %s566 = smul.addr %s565, 192
        %s567 = scalar_lea.vmem [#allocation5], %s566
        // Predicated region
        $region73: #{transformer_forward.1} parent=67 // pred_check
          %p568 = pneg %p146
        $region74: #{transformer_forward.1} parent=67 // pred_check_branch
          %570 = sbr.rel (%p568) target = $region76
        $region75: #{transformer_forward.1} parent=67 // pred_region
          %571 = dma.done %s564, 3072
        $region76: #{transformer_forward.1} parent=67 // pred_fallthru
          _
        %s572 = sand.u32 %s35, 1
        %s573 = scalar_lea.sflag [#allocation6], %s572
        %s574 = sand.u32 %s159, 1
        %s575 = smul.addr %s574, 64
        %s576 = scalar_lea.vmem [#allocation7], %s575
        // Predicated region
        $region77: #{transformer_forward.1} parent=67 // pred_check
          %p577 = pneg %p172
        $region78: #{transformer_forward.1} parent=67 // pred_check_branch
          %579 = sbr.rel (%p577) target = $region80
        $region79: #{transformer_forward.1} parent=67 // pred_region
          %580 = dma.done %s573, 1024
        $region80: #{transformer_forward.1} parent=67 // pred_fallthru
          _
        %s581 = sand.u32 %s35, 1
        %s582 = scalar_lea.sflag [#allocation9], %s581
        %s583 = sand.u32 %s263, 1
        %s584 = smul.addr %s583, 128
        %s585 = scalar_lea.vmem [#allocation8], %s584
        // Predicated region
        $region81: #{transformer_forward.1} parent=67 // pred_check
          %p586 = pneg %p276
        $region82: #{transformer_forward.1} parent=67 // pred_check_branch
          %588 = sbr.rel (%p586) target = $region84
        $region83: #{transformer_forward.1} parent=67 // pred_region
          %589 = dma.done %s582, 2048
        $region84: #{transformer_forward.1} parent=67 // pred_fallthru
          _
        %s590 = sand.u32 %s35, 1
        %s591 = scalar_lea.sflag [#allocation9], %s590
        %s592 = sand.u32 %s315, 1
        %s593 = smul.addr %s592, 128
        %s594 = scalar_lea.vmem [#allocation10], %s593
        // Predicated region
        $region85: #{transformer_forward.1} parent=67 // pred_check
          %p595 = pneg %p328
        $region86: #{transformer_forward.1} parent=67 // pred_check_branch
          %597 = sbr.rel (%p595) target = $region88
        $region87: #{transformer_forward.1} parent=67 // pred_region
          %598 = dma.done %s591, 2048
        $region88: #{transformer_forward.1} parent=67 // pred_fallthru
          _
        %s599 = sand.u32 %s55, 1
        %s600 = scalar_lea.sflag [#allocation3], %s599
        %s601 = sand.u32 %s55, 1
        %s602 = smul.addr %s601, 16
        %s603 = scalar_lea.vmem [#allocation2], %s602
        %p604 = pneg %p68
        %p605 = pneg %p65
        %p606 = scmp.lt.s32.totalorder %s40, 1
        %s607 = scalar_select %p606, %s40, 1
        %s608 = scalar_lea.vmem %s1, %s607
        %p609 = pneg %p94
        %p610 = pneg %p91
        %p611 = scmp.lt.s32.totalorder %s40, 1
        %s612 = scalar_select %p611, %s40, 1
        %s613 = scalar_lea.vmem %s2, %s612
        %p614 = pneg %p120
        %p615 = pneg %p117
        %s616 = sand.u32 %s35, 1
        %s617 = scalar_lea.sflag [#allocation6], %s616
        %s618 = sand.u32 %s133, 1
        %s619 = smul.addr %s618, 192
        %s620 = scalar_lea.vmem [#allocation5], %s619
        %p621 = pneg %p146
        %p622 = pneg %p143
        %s623 = sand.u32 %s35, 1
        %s624 = scalar_lea.sflag [#allocation6], %s623
        %s625 = sand.u32 %s159, 1
        %s626 = smul.addr %s625, 64
        %s627 = scalar_lea.vmem [#allocation7], %s626
        %p628 = pneg %p172
        %p629 = pneg %p169
        %p630 = scmp.lt.s32.totalorder %s40, 1
        %s631 = scalar_select %p630, %s40, 1
        %s632 = scalar_lea.vmem %s5, %s631
        %p633 = pneg %p198
        %p634 = pneg %p195
        %p635 = scmp.lt.s32.totalorder %s40, 1
        %s636 = scalar_select %p635, %s40, 1
        %s637 = scalar_lea.vmem %s6, %s636
        %p638 = pneg %p224
        %p639 = pneg %p221
        %p640 = scmp.lt.s32.totalorder %s40, 1
        %s641 = scalar_select %p640, %s40, 1
        %s642 = scalar_lea.vmem %s7, %s641
        %p643 = pneg %p250
        %p644 = pneg %p247
        %s645 = sand.u32 %s35, 1
        %s646 = scalar_lea.sflag [#allocation9], %s645
        %s647 = sand.u32 %s263, 1
        %s648 = smul.addr %s647, 128
        %s649 = scalar_lea.vmem [#allocation8], %s648
        %p650 = pneg %p276
        %p651 = pneg %p273
        %p652 = scmp.lt.s32.totalorder %s40, 1
        %s653 = scalar_select %p652, %s40, 1
        %s654 = smul.addr %s653, 2
        %s655 = scalar_lea.vmem %s9, %s654
        %p656 = pneg %p302
        %p657 = pneg %p299
        %s658 = sand.u32 %s35, 1
        %s659 = scalar_lea.sflag [#allocation9], %s658
        %s660 = sand.u32 %s315, 1
        %s661 = smul.addr %s660, 128
        %s662 = scalar_lea.vmem [#allocation10], %s661
        %p663 = pneg %p328
        %p664 = pneg %p325
        %p665 = scmp.lt.s32.totalorder %s40, 1
        %s666 = scalar_select %p665, %s40, 1
        %s667 = scalar_lea.vmem %s11, %s666
        %p668 = pneg %p354
        %p669 = pneg %p351
        %p670 = pneg %p380
        %p671 = pneg %p377
        %s672 = sand.u32 %s367, 1
        %s673 = scalar_lea.sflag [#allocation4], %s672
        %s674 = sand.u32 %s367, 1
        %s675 = smul.addr %s674, 16
        %s676 = scalar_lea.vmem [#allocation11], %s675
        %p677 = scmp.lt.s32.totalorder %s40, 1
        %s678 = scalar_select %p677, %s40, 1
        %s679 = scalar_lea.vmem %s1, %s678
        %p680 = scmp.lt.s32.totalorder %s40, 1
        %s681 = scalar_select %p680, %s40, 1
        %s682 = scalar_lea.vmem %s2, %s681
        %p683 = scmp.lt.s32.totalorder %s40, 1
        %s684 = scalar_select %p683, %s40, 1
        %s685 = scalar_lea.vmem %s5, %s684
        %p686 = scmp.lt.s32.totalorder %s40, 1
        %s687 = scalar_select %p686, %s40, 1
        %s688 = scalar_lea.vmem %s6, %s687
        %p689 = scmp.lt.s32.totalorder %s40, 1
        %s690 = scalar_select %p689, %s40, 1
        %s691 = scalar_lea.vmem %s7, %s690
        %p692 = scmp.lt.s32.totalorder %s40, 1
        %s693 = scalar_select %p692, %s40, 1
        %s694 = smul.addr %s693, 2
        %s695 = scalar_lea.vmem %s9, %s694
        %p696 = scmp.lt.s32.totalorder %s40, 1
        %s697 = scalar_select %p696, %s40, 1
        %s698 = scalar_lea.vmem %s11, %s697
        %p700 = scmp.eq.s32.totalorder %s40, 0
        // Predicated region
        $region89: #{transformer_forward.1} parent=67 // pred_check
          %p701 = pneg %p700
        $region90: #{transformer_forward.1} parent=67 // pred_check_branch
          %703 = sbr.rel (%p701) target = $region92
        $region91: #{transformer_forward.1} parent=67 // pred_region
          %v704 = vld [vmem:[%s558] sm:$0xff]
          %v705 = vld [vmem:[%s558 + $0x8] sm:$0xff]
          %706 = vst [vmem:[%s676] sm:$0xff] %v704
          %707 = vst [vmem:[%s676 + $0x8] sm:$0xff] %v705
        $region92: #{transformer_forward.1} parent=67 // pred_fallthru
          _
        %v708 = vld [vmem:[%s676] sm:$0xff]
        %v709 = vld [vmem:[%s676 + $0x8] sm:$0xff]
        %v710 = vld [vmem:[%s679] sm:$0x1]
        %v711 = vld [vmem:[%s682] sm:$0x1]
        %712 = vadd.xlane.f32.xlu0 %v708
        %v713 = vpop.xlane.xlu0 %712
        %714 = vadd.xlane.f32.xlu0 %v709
        %v715 = vpop.xlane.xlu0 %714
        %v716 = vrcp.pop 128.0
        %v717 = vmul.f32 %v713, %v716
        %v718 = vmul.f32 %v715, %v716
        %v719 = vsub.f32 %v708, %v717
        %v720 = vsub.f32 %v709, %v718
        %v721 = vmul.f32 %v719, %v719
        %v722 = vmul.f32 %v720, %v720
        %723 = vadd.xlane.f32.xlu0 %v721
        %v724 = vpop.xlane.xlu0 %723
        %725 = vadd.xlane.f32.xlu0 %v722
        %v726 = vpop.xlane.xlu0 %725
        %v727 = vmul.f32 %v724, %v716
        %v728 = vmul.f32 %v726, %v716
        %v729 = vadd.f32 %v727, 1e-05
        %v730 = vadd.f32 %v728, 1e-05
        %v731 = vrsqrt.pop %v729
        %v732 = vrsqrt.pop %v730
        %v733 = vmul.f32 %v719, %v731
        %v734 = vmul.f32 %v720, %v732
        %v736 = vlaneseq
        %v737 = vshrl.u32 %v736, 7
        %v738 = vsub.s32 0, %v737
        %v739 = vrot.slane %v710, %v738
        %v741 = vmul.f32 %v733, %v739
        %v742 = vmul.f32 %v734, %v739
        %v744 = vlaneseq
        %v745 = vshrl.u32 %v744, 7
        %v746 = vsub.s32 0, %v745
        %v747 = vrot.slane %v711, %v746
        %v749 = vadd.f32 %v741, %v747
        %v750 = vadd.f32 %v742, %v747
        %v751 = vpack.c.bf16 %v750, %v749
        %v752 = vld [vmem:[%s567] sm:$0xff]
        %v753 = vld [vmem:[%s567 + $0x8] sm:$0xf]
        %v754 = vld [vmem:[%s567 + $0xc] sm:$0xff]
        %v755 = vld [vmem:[%s567 + $0x14] sm:$0xf]
        %v756 = vld [vmem:[%s567 + $0x18] sm:$0xff]
        %v757 = vld [vmem:[%s567 + $0x20] sm:$0xf]
        %v758 = vld [vmem:[%s567 + $0x24] sm:$0xff]
        %v759 = vld [vmem:[%s567 + $0x2c] sm:$0xf]
        %v760 = vld [vmem:[%s567 + $0x30] sm:$0xff]
        %v761 = vld [vmem:[%s567 + $0x38] sm:$0xf]
        %v762 = vld [vmem:[%s567 + $0x3c] sm:$0xff]
        %v763 = vld [vmem:[%s567 + $0x44] sm:$0xf]
        %v764 = vld [vmem:[%s567 + $0x48] sm:$0xff]
        %v765 = vld [vmem:[%s567 + $0x50] sm:$0xf]
        %v766 = vld [vmem:[%s567 + $0x54] sm:$0xff]
        %v767 = vld [vmem:[%s567 + $0x5c] sm:$0xf]
        %v768 = vld [vmem:[%s567 + $0x60] sm:$0xff]
        %v769 = vld [vmem:[%s567 + $0x68] sm:$0xf]
        %v770 = vld [vmem:[%s567 + $0x6c] sm:$0xff]
        %v771 = vld [vmem:[%s567 + $0x74] sm:$0xf]
        %v772 = vld [vmem:[%s567 + $0x78] sm:$0xff]
        %v773 = vld [vmem:[%s567 + $0x80] sm:$0xf]
        %v774 = vld [vmem:[%s567 + $0x84] sm:$0xff]
        %v775 = vld [vmem:[%s567 + $0x8c] sm:$0xf]
        %v776 = vld [vmem:[%s567 + $0x90] sm:$0xff]
        %v777 = vld [vmem:[%s567 + $0x98] sm:$0xf]
        %v778 = vld [vmem:[%s567 + $0x9c] sm:$0xff]
        %v779 = vld [vmem:[%s567 + $0xa4] sm:$0xf]
        %v780 = vld [vmem:[%s567 + $0xa8] sm:$0xff]
        %v781 = vld [vmem:[%s567 + $0xb0] sm:$0xf]
        %v782 = vld [vmem:[%s567 + $0xb4] sm:$0xff]
        %v783 = vld [vmem:[%s567 + $0xbc] sm:$0xf]
        %v816 = vunpack.c.l.b16 %v752
        %v817 = vunpack.c.h.b16 %v752
        %v818 = vunpack.c.l.b16 %v753
        %v819 = vunpack.c.l.b16 %v754
        %v820 = vunpack.c.h.b16 %v754
        %v821 = vunpack.c.l.b16 %v755
        %v822 = vunpack.c.l.b16 %v756
        %v823 = vunpack.c.h.b16 %v756
        %v824 = vunpack.c.l.b16 %v757
        %v825 = vunpack.c.l.b16 %v758
        %v826 = vunpack.c.h.b16 %v758
        %v827 = vunpack.c.l.b16 %v759
        %v828 = vunpack.c.l.b16 %v760
        %v829 = vunpack.c.h.b16 %v760
        %v830 = vunpack.c.l.b16 %v761
        %v831 = vunpack.c.l.b16 %v762
        %v832 = vunpack.c.h.b16 %v762
        %v833 = vunpack.c.l.b16 %v763
        %v834 = vunpack.c.l.b16 %v764
        %v835 = vunpack.c.h.b16 %v764
        %v836 = vunpack.c.l.b16 %v765
        %v837 = vunpack.c.l.b16 %v766
        %v838 = vunpack.c.h.b16 %v766
        %v839 = vunpack.c.l.b16 %v767
        %v840 = vunpack.c.l.b16 %v768
        %v841 = vunpack.c.h.b16 %v768
        %v842 = vunpack.c.l.b16 %v769
        %v843 = vunpack.c.l.b16 %v770
        %v844 = vunpack.c.h.b16 %v770
        %v845 = vunpack.c.l.b16 %v771
        %v846 = vunpack.c.l.b16 %v772
        %v847 = vunpack.c.h.b16 %v772
        %v848 = vunpack.c.l.b16 %v773
        %v849 = vunpack.c.l.b16 %v774
        %v850 = vunpack.c.h.b16 %v774
        %v851 = vunpack.c.l.b16 %v775
        %v852 = vunpack.c.l.b16 %v776
        %v853 = vunpack.c.h.b16 %v776
        %v854 = vunpack.c.l.b16 %v777
        %v855 = vunpack.c.l.b16 %v778
        %v856 = vunpack.c.h.b16 %v778
        %v857 = vunpack.c.l.b16 %v779
        %v858 = vunpack.c.l.b16 %v780
        %v859 = vunpack.c.h.b16 %v780
        %v860 = vunpack.c.l.b16 %v781
        %v861 = vunpack.c.l.b16 %v782
        %v862 = vunpack.c.h.b16 %v782
        %v863 = vunpack.c.l.b16 %v783
        %v864 = vpack.c.b16 %v819, %v816
        %v865 = vpack.c.b16 %v820, %v817
        %v866 = vpack.c.b16 %v821, %v818
        %v867 = vpack.c.b16 %v825, %v822
        %v868 = vpack.c.b16 %v826, %v823
        %v869 = vpack.c.b16 %v827, %v824
        %v870 = vpack.c.b16 %v831, %v828
        %v871 = vpack.c.b16 %v832, %v829
        %v872 = vpack.c.b16 %v833, %v830
        %v873 = vpack.c.b16 %v837, %v834
        %v874 = vpack.c.b16 %v838, %v835
        %v875 = vpack.c.b16 %v839, %v836
        %v876 = vpack.c.b16 %v843, %v840
        %v877 = vpack.c.b16 %v844, %v841
        %v878 = vpack.c.b16 %v845, %v842
        %v879 = vpack.c.b16 %v849, %v846
        %v880 = vpack.c.b16 %v850, %v847
        %v881 = vpack.c.b16 %v851, %v848
        %v882 = vpack.c.b16 %v855, %v852
        %v883 = vpack.c.b16 %v856, %v853
        %v884 = vpack.c.b16 %v857, %v854
        %v885 = vpack.c.b16 %v861, %v858
        %v886 = vpack.c.b16 %v862, %v859
        %v887 = vpack.c.b16 %v863, %v860
        %912 = vmatprep.subr.bf16.mxu0 %v865
        %913 = vmatpush1.bf16.msra.mxu0 %v864
        %914 = vmatprep.subr.bf16.mxu0 %v868
        %915 = vmatpush1.bf16.msra.mxu0 %v867
        %916 = vmatprep.subr.bf16.mxu0 %v871
        %917 = vmatpush1.bf16.msra.mxu0 %v870
        %918 = vmatprep.subr.bf16.mxu0 %v874
        %919 = vmatpush1.bf16.msra.mxu0 %v873
        %920 = vmatprep.subr.bf16.mxu0 %v877
        %921 = vmatpush1.bf16.msra.mxu0 %v876
        %922 = vmatprep.subr.bf16.mxu0 %v880
        %923 = vmatpush1.bf16.msra.mxu0 %v879
        %924 = vmatprep.subr.bf16.mxu0 %v883
        %925 = vmatpush1.bf16.msra.mxu0 %v882
        %926 = vmatprep.subr.bf16.mxu0 %v886
        %927 = vmatpush1.bf16.msra.mxu0 %v885
        %928 = vmatprep.subr.bf16.mxu0 0
        %929 = vmatpush1.bf16.msra.mxu0 0
        %930 = vmatprep.subr.bf16.mxu0 0
        %931 = vmatpush1.bf16.msra.mxu0 0
        %932 = vmatprep.subr.bf16.mxu0 0
        %933 = vmatpush1.bf16.msra.mxu0 0
        %934 = vmatprep.subr.bf16.mxu0 0
        %935 = vmatpush1.bf16.msra.mxu0 0
        %936 = vmatprep.subr.bf16.mxu0 0
        %937 = vmatpush1.bf16.msra.mxu0 0
        %938 = vmatprep.subr.bf16.mxu0 0
        %939 = vmatpush1.bf16.msra.mxu0 0
        %940 = vmatprep.subr.bf16.mxu0 0
        %941 = vmatpush1.bf16.msra.mxu0 0
        %942 = vmatprep.subr.bf16.mxu0 0
        %943 = vmatpush1.bf16.msra.mxu0 0
        %944 = vmatprep.mubr.bf16.mxu0 0
        %945 = vmatmul.mubr.bf16.gmra.mrb[0].mxu0 %v751
        %v946 = vpop.f32.mrb[0].mxu0
        %v947 = vadd.f32 0.0, %v946
        %v948 = vpop.f32.mrb[0].mxu0
        %v949 = vadd.f32 0.0, %v948
        %v950 = vpop.f32.mrb[0].mxu0
        %v951 = vadd.f32 0.0, %v950
        %v952 = vpop.f32.mrb[0].mxu0
        %v953 = vadd.f32 0.0, %v952
        %954 = vdwg.mxu0
        %955 = vmatprep.subr.bf16.mxu0 0
        %956 = vmatpush1.bf16.msra.mxu0 %v866
        %957 = vmatprep.subr.bf16.mxu0 0
        %958 = vmatpush1.bf16.msra.mxu0 %v869
        %959 = vmatprep.subr.bf16.mxu0 0
        %960 = vmatpush1.bf16.msra.mxu0 %v872
        %961 = vmatprep.subr.bf16.mxu0 0
        %962 = vmatpush1.bf16.msra.mxu0 %v875
        %963 = vmatprep.subr.bf16.mxu0 0
        %964 = vmatpush1.bf16.msra.mxu0 %v878
        %965 = vmatprep.subr.bf16.mxu0 0
        %966 = vmatpush1.bf16.msra.mxu0 %v881
        %967 = vmatprep.subr.bf16.mxu0 0
        %968 = vmatpush1.bf16.msra.mxu0 %v884
        %969 = vmatprep.subr.bf16.mxu0 0
        %970 = vmatpush1.bf16.msra.mxu0 %v887
        %971 = vmatprep.subr.bf16.mxu0 0
        %972 = vmatpush1.bf16.msra.mxu0 0
        %973 = vmatprep.subr.bf16.mxu0 0
        %974 = vmatpush1.bf16.msra.mxu0 0
        %975 = vmatprep.subr.bf16.mxu0 0
        %976 = vmatpush1.bf16.msra.mxu0 0
        %977 = vmatprep.subr.bf16.mxu0 0
        %978 = vmatpush1.bf16.msra.mxu0 0
        %979 = vmatprep.subr.bf16.mxu0 0
        %980 = vmatpush1.bf16.msra.mxu0 0
        %981 = vmatprep.subr.bf16.mxu0 0
        %982 = vmatpush1.bf16.msra.mxu0 0
        %983 = vmatprep.subr.bf16.mxu0 0
        %984 = vmatpush1.bf16.msra.mxu0 0
        %985 = vmatprep.subr.bf16.mxu0 0
        %986 = vmatpush1.bf16.msra.mxu0 0
        %987 = vmatprep.mubr.bf16.mxu0 0
        %988 = vmatmul.mubr.bf16.gmra.mrb[0].mxu0 %v751
        %v989 = vpop.f32.mrb[0].mxu0
        %v990 = vadd.f32 0.0, %v989
        %v991 = vpop.f32.mrb[0].mxu0
        %v992 = vpop.f32.mrb[0].mxu0
        %v993 = vadd.f32 0.0, %v992
        %v994 = vpop.f32.mrb[0].mxu0
        %995 = vdwg.mxu0
        %v996 = vmul.f32 %v947, 0.17677669
        %v997 = vmul.f32 %v951, 0.17677669
        %v998 = vpack.c.bf16 %v997, %v996
        %v999 = vpack.c.bf16 %v953, %v949
        %v1000 = vpack.c.bf16 %v993, %v990
        %vm1001 = vcmask 261120
        %v1003 = vsel %vm1001, %v998, 0
        %v1006 = vsel %vm1001, %v999, 0
        %1008 = vmatprep.subr.bf16.mxu0 0
        %1009 = vmatpush1.bf16.xpose.msra.mxu0 %v1006
        %1010 = vmatprep.subr.bf16.mxu0 0
        %1011 = vmatpush1.bf16.xpose.msra.mxu0 0
        %1012 = vmatprep.subr.bf16.mxu0 0
        %1013 = vmatpush1.bf16.xpose.msra.mxu0 0
        %1014 = vmatprep.subr.bf16.mxu0 0
        %1015 = vmatpush1.bf16.xpose.msra.mxu0 0
        %1016 = vmatprep.subr.bf16.mxu0 0
        %1017 = vmatpush1.bf16.xpose.msra.mxu0 0
        %1018 = vmatprep.subr.bf16.mxu0 0
        %1019 = vmatpush1.bf16.xpose.msra.mxu0 0
        %1020 = vmatprep.subr.bf16.mxu0 0
        %1021 = vmatpush1.bf16.xpose.msra.mxu0 0
        %1022 = vmatprep.subr.bf16.mxu0 0
        %1023 = vmatpush1.bf16.xpose.msra.mxu0 0
        %1024 = vmatprep.subr.bf16.mxu0 0
        %1025 = vmatpush1.bf16.xpose.msra.mxu0 0
        %1026 = vmatprep.subr.bf16.mxu0 0
        %1027 = vmatpush1.bf16.xpose.msra.mxu0 0
        %1028 = vmatprep.subr.bf16.mxu0 0
        %1029 = vmatpush1.bf16.xpose.msra.mxu0 0
        %1030 = vmatprep.subr.bf16.mxu0 0
        %1031 = vmatpush1.bf16.xpose.msra.mxu0 0
        %1032 = vmatprep.subr.bf16.mxu0 0
        %1033 = vmatpush1.bf16.xpose.msra.mxu0 0
        %1034 = vmatprep.subr.bf16.mxu0 0
        %1035 = vmatpush1.bf16.xpose.msra.mxu0 0
        %1036 = vmatprep.subr.bf16.mxu0 0
        %1037 = vmatpush1.bf16.xpose.msra.mxu0 0
        %1038 = vmatprep.subr.bf16.mxu0 0
        %1039 = vmatpush1.bf16.xpose.msra.mxu0 0
        %1040 = vmatprep.mubr.bf16.mxu0 0
        %1041 = vmatmul.mubr.bf16.gmra.mrb[0].mxu0 %v1003
        %v1042 = vpop.f32.mrb[0].mxu0
        %v1043 = vadd.f32 0.0, %v1042
        %v1044 = vpop.f32.mrb[0].mxu0
        %v1045 = vpop.f32.mrb[0].mxu0
        %v1046 = vadd.f32 0.0, %v1045
        %v1047 = vpop.f32.mrb[0].mxu0
        %1048 = vdwg.mxu0
        %vm1049 = vcmask 130048
        %v1050 = vsel %vm1049, %v1043, -inf
        %1051 = vmax.xlane.f32.xlu0 %v1050
        %v1052 = vpop.xlane.xlu0 %1051
        %v1053 = vsel %vm1049, %v1046, -inf
        %1054 = vmax.xlane.f32.xlu0 %v1053
        %v1055 = vpop.xlane.xlu0 %1054
        %v1056 = vsub.f32 %v1043, %v1052
        %v1057 = vsub.f32 %v1046, %v1055
        %v1058 = vmul.f32 %v1056, 1.442695
        %v1059 = vpow.pop %v1058
        %v1060 = vmul.f32 %v1057, 1.442695
        %v1061 = vpow.pop %v1060
        %v1062 = vsel %vm1049, %v1059, 0.0
        %1063 = vadd.xlane.f32.xlu0 %v1062
        %v1064 = vpop.xlane.xlu0 %1063
        %v1065 = vsel %vm1049, %v1061, 0.0
        %1066 = vadd.xlane.f32.xlu0 %v1065
        %v1067 = vpop.xlane.xlu0 %1066
        %v1068 = vrcp.pop %v1064
        %v1069 = vrcp.pop %v1067
        %v1070 = vmul.f32 %v1059, %v1068
        %v1071 = vmul.f32 %v1061, %v1069
        %v1072 = vpack.c.bf16 %v1071, %v1070
        %v1074 = vsel %vm1049, %v1072, 0
        %1076 = vmatprep.subr.bf16.mxu0 0
        %1077 = vmatpush1.bf16.msra.mxu0 %v1000
        %1078 = vmatprep.subr.bf16.mxu0 0
        %1079 = vmatpush1.bf16.msra.mxu0 0
        %1080 = vmatprep.subr.bf16.mxu0 0
        %1081 = vmatpush1.bf16.msra.mxu0 0
        %1082 = vmatprep.subr.bf16.mxu0 0
        %1083 = vmatpush1.bf16.msra.mxu0 0
        %1084 = vmatprep.subr.bf16.mxu0 0
        %1085 = vmatpush1.bf16.msra.mxu0 0
        %1086 = vmatprep.subr.bf16.mxu0 0
        %1087 = vmatpush1.bf16.msra.mxu0 0
        %1088 = vmatprep.subr.bf16.mxu0 0
        %1089 = vmatpush1.bf16.msra.mxu0 0
        %1090 = vmatprep.subr.bf16.mxu0 0
        %1091 = vmatpush1.bf16.msra.mxu0 0
        %1092 = vmatprep.subr.bf16.mxu0 0
        %1093 = vmatpush1.bf16.msra.mxu0 0
        %1094 = vmatprep.subr.bf16.mxu0 0
        %1095 = vmatpush1.bf16.msra.mxu0 0
        %1096 = vmatprep.subr.bf16.mxu0 0
        %1097 = vmatpush1.bf16.msra.mxu0 0
        %1098 = vmatprep.subr.bf16.mxu0 0
        %1099 = vmatpush1.bf16.msra.mxu0 0
        %1100 = vmatprep.subr.bf16.mxu0 0
        %1101 = vmatpush1.bf16.msra.mxu0 0
        %1102 = vmatprep.subr.bf16.mxu0 0
        %1103 = vmatpush1.bf16.msra.mxu0 0
        %1104 = vmatprep.subr.bf16.mxu0 0
        %1105 = vmatpush1.bf16.msra.mxu0 0
        %1106 = vmatprep.subr.bf16.mxu0 0
        %1107 = vmatpush1.bf16.msra.mxu0 0
        %1108 = vmatprep.mubr.bf16.mxu0 0
        %1109 = vmatmul.mubr.bf16.gmra.mrb[0].mxu0 %v1074
        %v1110 = vpop.f32.mrb[0].mxu0
        %v1111 = vadd.f32 0.0, %v1110
        %v1112 = vpop.f32.mrb[0].mxu0
        %v1113 = vpop.f32.mrb[0].mxu0
        %v1114 = vadd.f32 0.0, %v1113
        %v1115 = vpop.f32.mrb[0].mxu0
        %1116 = vdwg.mxu0
        %1118 = vrot.lane.b32.xlu0 %v998, 96
        %v1119 = vpop.permute.xlu0 %1118
        %1121 = vrot.lane.b32.xlu0 %v999, 96
        %v1122 = vpop.permute.xlu0 %1121
        %v1124 = vsel %vm1001, %v1119, 0
        %v1127 = vsel %vm1001, %v1122, 0
        %1129 = vmatprep.subr.bf16.mxu0 0
        %1130 = vmatpush1.bf16.xpose.msra.mxu0 %v1127
        %1131 = vmatprep.subr.bf16.mxu0 0
        %1132 = vmatpush1.bf16.xpose.msra.mxu0 0
        %1133 = vmatprep.subr.bf16.mxu0 0
        %1134 = vmatpush1.bf16.xpose.msra.mxu0 0
        %1135 = vmatprep.subr.bf16.mxu0 0
        %1136 = vmatpush1.bf16.xpose.msra.mxu0 0
        %1137 = vmatprep.subr.bf16.mxu0 0
        %1138 = vmatpush1.bf16.xpose.msra.mxu0 0
        %1139 = vmatprep.subr.bf16.mxu0 0
        %1140 = vmatpush1.bf16.xpose.msra.mxu0 0
        %1141 = vmatprep.subr.bf16.mxu0 0
        %1142 = vmatpush1.bf16.xpose.msra.mxu0 0
        %1143 = vmatprep.subr.bf16.mxu0 0
        %1144 = vmatpush1.bf16.xpose.msra.mxu0 0
        %1145 = vmatprep.subr.bf16.mxu0 0
        %1146 = vmatpush1.bf16.xpose.msra.mxu0 0
        %1147 = vmatprep.subr.bf16.mxu0 0
        %1148 = vmatpush1.bf16.xpose.msra.mxu0 0
        %1149 = vmatprep.subr.bf16.mxu0 0
        %1150 = vmatpush1.bf16.xpose.msra.mxu0 0
        %1151 = vmatprep.subr.bf16.mxu0 0
        %1152 = vmatpush1.bf16.xpose.msra.mxu0 0
        %1153 = vmatprep.subr.bf16.mxu0 0
        %1154 = vmatpush1.bf16.xpose.msra.mxu0 0
        %1155 = vmatprep.subr.bf16.mxu0 0
        %1156 = vmatpush1.bf16.xpose.msra.mxu0 0
        %1157 = vmatprep.subr.bf16.mxu0 0
        %1158 = vmatpush1.bf16.xpose.msra.mxu0 0
        %1159 = vmatprep.subr.bf16.mxu0 0
        %1160 = vmatpush1.bf16.xpose.msra.mxu0 0
        %1161 = vmatprep.mubr.bf16.mxu0 0
        %1162 = vmatmul.mubr.bf16.gmra.mrb[0].mxu0 %v1124
        %v1163 = vpop.f32.mrb[0].mxu0
        %v1164 = vadd.f32 0.0, %v1163
        %v1165 = vpop.f32.mrb[0].mxu0
        %v1166 = vpop.f32.mrb[0].mxu0
        %v1167 = vadd.f32 0.0, %v1166
        %v1168 = vpop.f32.mrb[0].mxu0
        %1169 = vdwg.mxu0
        %v1170 = vsel %vm1049, %v1164, -inf
        %1171 = vmax.xlane.f32.xlu0 %v1170
        %v1172 = vpop.xlane.xlu0 %1171
        %v1173 = vsel %vm1049, %v1167, -inf
        %1174 = vmax.xlane.f32.xlu0 %v1173
        %v1175 = vpop.xlane.xlu0 %1174
        %v1176 = vsub.f32 %v1164, %v1172
        %v1177 = vsub.f32 %v1167, %v1175
        %v1178 = vmul.f32 %v1176, 1.442695
        %v1179 = vpow.pop %v1178
        %v1180 = vmul.f32 %v1177, 1.442695
        %v1181 = vpow.pop %v1180
        %v1182 = vsel %vm1049, %v1179, 0.0
        %1183 = vadd.xlane.f32.xlu0 %v1182
        %v1184 = vpop.xlane.xlu0 %1183
        %v1185 = vsel %vm1049, %v1181, 0.0
        %1186 = vadd.xlane.f32.xlu0 %v1185
        %v1187 = vpop.xlane.xlu0 %1186
        %v1188 = vrcp.pop %v1184
        %v1189 = vrcp.pop %v1187
        %v1190 = vmul.f32 %v1179, %v1188
        %v1191 = vmul.f32 %v1181, %v1189
        %v1192 = vpack.c.bf16 %v1191, %v1190
        %1194 = vrot.lane.b32.xlu0 %v1000, 96
        %v1195 = vpop.permute.xlu0 %1194
        %v1198 = vsel %vm1049, %v1192, 0
        %1200 = vmatprep.subr.bf16.mxu0 0
        %1201 = vmatpush1.bf16.msra.mxu0 %v1195
        %1202 = vmatprep.subr.bf16.mxu0 0
        %1203 = vmatpush1.bf16.msra.mxu0 0
        %1204 = vmatprep.subr.bf16.mxu0 0
        %1205 = vmatpush1.bf16.msra.mxu0 0
        %1206 = vmatprep.subr.bf16.mxu0 0
        %1207 = vmatpush1.bf16.msra.mxu0 0
        %1208 = vmatprep.subr.bf16.mxu0 0
        %1209 = vmatpush1.bf16.msra.mxu0 0
        %1210 = vmatprep.subr.bf16.mxu0 0
        %1211 = vmatpush1.bf16.msra.mxu0 0
        %1212 = vmatprep.subr.bf16.mxu0 0
        %1213 = vmatpush1.bf16.msra.mxu0 0
        %1214 = vmatprep.subr.bf16.mxu0 0
        %1215 = vmatpush1.bf16.msra.mxu0 0
        %1216 = vmatprep.subr.bf16.mxu0 0
        %1217 = vmatpush1.bf16.msra.mxu0 0
        %1218 = vmatprep.subr.bf16.mxu0 0
        %1219 = vmatpush1.bf16.msra.mxu0 0
        %1220 = vmatprep.subr.bf16.mxu0 0
        %1221 = vmatpush1.bf16.msra.mxu0 0
        %1222 = vmatprep.subr.bf16.mxu0 0
        %1223 = vmatpush1.bf16.msra.mxu0 0
        %1224 = vmatprep.subr.bf16.mxu0 0
        %1225 = vmatpush1.bf16.msra.mxu0 0
        %1226 = vmatprep.subr.bf16.mxu0 0
        %1227 = vmatpush1.bf16.msra.mxu0 0
        %1228 = vmatprep.subr.bf16.mxu0 0
        %1229 = vmatpush1.bf16.msra.mxu0 0
        %1230 = vmatprep.subr.bf16.mxu0 0
        %1231 = vmatpush1.bf16.msra.mxu0 0
        %1232 = vmatprep.mubr.bf16.mxu0 0
        %1233 = vmatmul.mubr.bf16.gmra.mrb[0].mxu0 %v1198
        %v1234 = vpop.f32.mrb[0].mxu0
        %v1235 = vadd.f32 0.0, %v1234
        %v1236 = vpop.f32.mrb[0].mxu0
        %v1237 = vpop.f32.mrb[0].mxu0
        %v1238 = vadd.f32 0.0, %v1237
        %v1239 = vpop.f32.mrb[0].mxu0
        %1240 = vdwg.mxu0
        %1241 = vrot.lane.b32.xlu0 %v998, 64
        %v1242 = vpop.permute.xlu0 %1241
        %1243 = vrot.lane.b32.xlu0 %v999, 64
        %v1244 = vpop.permute.xlu0 %1243
        %v1246 = vsel %vm1001, %v1242, 0
        %v1249 = vsel %vm1001, %v1244, 0
        %1251 = vmatprep.subr.bf16.mxu0 0
        %1252 = vmatpush1.bf16.xpose.msra.mxu0 %v1249
        %1253 = vmatprep.subr.bf16.mxu0 0
        %1254 = vmatpush1.bf16.xpose.msra.mxu0 0
        %1255 = vmatprep.subr.bf16.mxu0 0
        %1256 = vmatpush1.bf16.xpose.msra.mxu0 0
        %1257 = vmatprep.subr.bf16.mxu0 0
        %1258 = vmatpush1.bf16.xpose.msra.mxu0 0
        %1259 = vmatprep.subr.bf16.mxu0 0
        %1260 = vmatpush1.bf16.xpose.msra.mxu0 0
        %1261 = vmatprep.subr.bf16.mxu0 0
        %1262 = vmatpush1.bf16.xpose.msra.mxu0 0
        %1263 = vmatprep.subr.bf16.mxu0 0
        %1264 = vmatpush1.bf16.xpose.msra.mxu0 0
        %1265 = vmatprep.subr.bf16.mxu0 0
        %1266 = vmatpush1.bf16.xpose.msra.mxu0 0
        %1267 = vmatprep.subr.bf16.mxu0 0
        %1268 = vmatpush1.bf16.xpose.msra.mxu0 0
        %1269 = vmatprep.subr.bf16.mxu0 0
        %1270 = vmatpush1.bf16.xpose.msra.mxu0 0
        %1271 = vmatprep.subr.bf16.mxu0 0
        %1272 = vmatpush1.bf16.xpose.msra.mxu0 0
        %1273 = vmatprep.subr.bf16.mxu0 0
        %1274 = vmatpush1.bf16.xpose.msra.mxu0 0
        %1275 = vmatprep.subr.bf16.mxu0 0
        %1276 = vmatpush1.bf16.xpose.msra.mxu0 0
        %1277 = vmatprep.subr.bf16.mxu0 0
        %1278 = vmatpush1.bf16.xpose.msra.mxu0 0
        %1279 = vmatprep.subr.bf16.mxu0 0
        %1280 = vmatpush1.bf16.xpose.msra.mxu0 0
        %1281 = vmatprep.subr.bf16.mxu0 0
        %1282 = vmatpush1.bf16.xpose.msra.mxu0 0
        %1283 = vmatprep.mubr.bf16.mxu0 0
        %1284 = vmatmul.mubr.bf16.gmra.mrb[0].mxu0 %v1246
        %v1285 = vpop.f32.mrb[0].mxu0
        %v1286 = vadd.f32 0.0, %v1285
        %v1287 = vpop.f32.mrb[0].mxu0
        %v1288 = vpop.f32.mrb[0].mxu0
        %v1289 = vadd.f32 0.0, %v1288
        %v1290 = vpop.f32.mrb[0].mxu0
        %1291 = vdwg.mxu0
        %v1292 = vsel %vm1049, %v1286, -inf
        %1293 = vmax.xlane.f32.xlu0 %v1292
        %v1294 = vpop.xlane.xlu0 %1293
        %v1295 = vsel %vm1049, %v1289, -inf
        %1296 = vmax.xlane.f32.xlu0 %v1295
        %v1297 = vpop.xlane.xlu0 %1296
        %v1298 = vsub.f32 %v1286, %v1294
        %v1299 = vsub.f32 %v1289, %v1297
        %v1300 = vmul.f32 %v1298, 1.442695
        %v1301 = vpow.pop %v1300
        %v1302 = vmul.f32 %v1299, 1.442695
        %v1303 = vpow.pop %v1302
        %v1304 = vsel %vm1049, %v1301, 0.0
        %1305 = vadd.xlane.f32.xlu0 %v1304
        %v1306 = vpop.xlane.xlu0 %1305
        %v1307 = vsel %vm1049, %v1303, 0.0
        %1308 = vadd.xlane.f32.xlu0 %v1307
        %v1309 = vpop.xlane.xlu0 %1308
        %v1310 = vrcp.pop %v1306
        %v1311 = vrcp.pop %v1309
        %v1312 = vmul.f32 %v1301, %v1310
        %v1313 = vmul.f32 %v1303, %v1311
        %v1314 = vpack.c.bf16 %v1313, %v1312
        %1315 = vrot.lane.b32.xlu0 %v1000, 64
        %v1316 = vpop.permute.xlu0 %1315
        %v1319 = vsel %vm1049, %v1314, 0
        %1321 = vmatprep.subr.bf16.mxu0 0
        %1322 = vmatpush1.bf16.msra.mxu0 %v1316
        %1323 = vmatprep.subr.bf16.mxu0 0
        %1324 = vmatpush1.bf16.msra.mxu0 0
        %1325 = vmatprep.subr.bf16.mxu0 0
        %1326 = vmatpush1.bf16.msra.mxu0 0
        %1327 = vmatprep.subr.bf16.mxu0 0
        %1328 = vmatpush1.bf16.msra.mxu0 0
        %1329 = vmatprep.subr.bf16.mxu0 0
        %1330 = vmatpush1.bf16.msra.mxu0 0
        %1331 = vmatprep.subr.bf16.mxu0 0
        %1332 = vmatpush1.bf16.msra.mxu0 0
        %1333 = vmatprep.subr.bf16.mxu0 0
        %1334 = vmatpush1.bf16.msra.mxu0 0
        %1335 = vmatprep.subr.bf16.mxu0 0
        %1336 = vmatpush1.bf16.msra.mxu0 0
        %1337 = vmatprep.subr.bf16.mxu0 0
        %1338 = vmatpush1.bf16.msra.mxu0 0
        %1339 = vmatprep.subr.bf16.mxu0 0
        %1340 = vmatpush1.bf16.msra.mxu0 0
        %1341 = vmatprep.subr.bf16.mxu0 0
        %1342 = vmatpush1.bf16.msra.mxu0 0
        %1343 = vmatprep.subr.bf16.mxu0 0
        %1344 = vmatpush1.bf16.msra.mxu0 0
        %1345 = vmatprep.subr.bf16.mxu0 0
        %1346 = vmatpush1.bf16.msra.mxu0 0
        %1347 = vmatprep.subr.bf16.mxu0 0
        %1348 = vmatpush1.bf16.msra.mxu0 0
        %1349 = vmatprep.subr.bf16.mxu0 0
        %1350 = vmatpush1.bf16.msra.mxu0 0
        %1351 = vmatprep.subr.bf16.mxu0 0
        %1352 = vmatpush1.bf16.msra.mxu0 0
        %1353 = vmatprep.mubr.bf16.mxu0 0
        %1354 = vmatmul.mubr.bf16.gmra.mrb[0].mxu0 %v1319
        %v1355 = vpop.f32.mrb[0].mxu0
        %v1356 = vadd.f32 0.0, %v1355
        %v1357 = vpop.f32.mrb[0].mxu0
        %v1358 = vpop.f32.mrb[0].mxu0
        %v1359 = vadd.f32 0.0, %v1358
        %v1360 = vpop.f32.mrb[0].mxu0
        %1361 = vdwg.mxu0
        %1362 = vrot.lane.b32.xlu0 %v998, 32
        %v1363 = vpop.permute.xlu0 %1362
        %1364 = vrot.lane.b32.xlu0 %v999, 32
        %v1365 = vpop.permute.xlu0 %1364
        %v1367 = vsel %vm1001, %v1363, 0
        %v1370 = vsel %vm1001, %v1365, 0
        %1372 = vmatprep.subr.bf16.mxu0 0
        %1373 = vmatpush1.bf16.xpose.msra.mxu0 %v1370
        %1374 = vmatprep.subr.bf16.mxu0 0
        %1375 = vmatpush1.bf16.xpose.msra.mxu0 0
        %1376 = vmatprep.subr.bf16.mxu0 0
        %1377 = vmatpush1.bf16.xpose.msra.mxu0 0
        %1378 = vmatprep.subr.bf16.mxu0 0
        %1379 = vmatpush1.bf16.xpose.msra.mxu0 0
        %1380 = vmatprep.subr.bf16.mxu0 0
        %1381 = vmatpush1.bf16.xpose.msra.mxu0 0
        %1382 = vmatprep.subr.bf16.mxu0 0
        %1383 = vmatpush1.bf16.xpose.msra.mxu0 0
        %1384 = vmatprep.subr.bf16.mxu0 0
        %1385 = vmatpush1.bf16.xpose.msra.mxu0 0
        %1386 = vmatprep.subr.bf16.mxu0 0
        %1387 = vmatpush1.bf16.xpose.msra.mxu0 0
        %1388 = vmatprep.subr.bf16.mxu0 0
        %1389 = vmatpush1.bf16.xpose.msra.mxu0 0
        %1390 = vmatprep.subr.bf16.mxu0 0
        %1391 = vmatpush1.bf16.xpose.msra.mxu0 0
        %1392 = vmatprep.subr.bf16.mxu0 0
        %1393 = vmatpush1.bf16.xpose.msra.mxu0 0
        %1394 = vmatprep.subr.bf16.mxu0 0
        %1395 = vmatpush1.bf16.xpose.msra.mxu0 0
        %1396 = vmatprep.subr.bf16.mxu0 0
        %1397 = vmatpush1.bf16.xpose.msra.mxu0 0
        %1398 = vmatprep.subr.bf16.mxu0 0
        %1399 = vmatpush1.bf16.xpose.msra.mxu0 0
        %1400 = vmatprep.subr.bf16.mxu0 0
        %1401 = vmatpush1.bf16.xpose.msra.mxu0 0
        %1402 = vmatprep.subr.bf16.mxu0 0
        %1403 = vmatpush1.bf16.xpose.msra.mxu0 0
        %1404 = vmatprep.mubr.bf16.mxu0 0
        %1405 = vmatmul.mubr.bf16.gmra.mrb[0].mxu0 %v1367
        %v1406 = vpop.f32.mrb[0].mxu0
        %v1407 = vadd.f32 0.0, %v1406
        %v1408 = vpop.f32.mrb[0].mxu0
        %v1409 = vpop.f32.mrb[0].mxu0
        %v1410 = vadd.f32 0.0, %v1409
        %v1411 = vpop.f32.mrb[0].mxu0
        %1412 = vdwg.mxu0
        %v1413 = vsel %vm1049, %v1407, -inf
        %1414 = vmax.xlane.f32.xlu0 %v1413
        %v1415 = vpop.xlane.xlu0 %1414
        %v1416 = vsel %vm1049, %v1410, -inf
        %1417 = vmax.xlane.f32.xlu0 %v1416
        %v1418 = vpop.xlane.xlu0 %1417
        %v1419 = vsub.f32 %v1407, %v1415
        %v1420 = vsub.f32 %v1410, %v1418
        %v1421 = vmul.f32 %v1419, 1.442695
        %v1422 = vpow.pop %v1421
        %v1423 = vmul.f32 %v1420, 1.442695
        %v1424 = vpow.pop %v1423
        %v1425 = vsel %vm1049, %v1422, 0.0
        %1426 = vadd.xlane.f32.xlu0 %v1425
        %v1427 = vpop.xlane.xlu0 %1426
        %v1428 = vsel %vm1049, %v1424, 0.0
        %1429 = vadd.xlane.f32.xlu0 %v1428
        %v1430 = vpop.xlane.xlu0 %1429
        %v1431 = vrcp.pop %v1427
        %v1432 = vrcp.pop %v1430
        %v1433 = vmul.f32 %v1422, %v1431
        %v1434 = vmul.f32 %v1424, %v1432
        %v1435 = vpack.c.bf16 %v1434, %v1433
        %1436 = vrot.lane.b32.xlu0 %v1000, 32
        %v1437 = vpop.permute.xlu0 %1436
        %v1440 = vsel %vm1049, %v1435, 0
        %1442 = vmatprep.subr.bf16.mxu0 0
        %1443 = vmatpush1.bf16.msra.mxu0 %v1437
        %1444 = vmatprep.subr.bf16.mxu0 0
        %1445 = vmatpush1.bf16.msra.mxu0 0
        %1446 = vmatprep.subr.bf16.mxu0 0
        %1447 = vmatpush1.bf16.msra.mxu0 0
        %1448 = vmatprep.subr.bf16.mxu0 0
        %1449 = vmatpush1.bf16.msra.mxu0 0
        %1450 = vmatprep.subr.bf16.mxu0 0
        %1451 = vmatpush1.bf16.msra.mxu0 0
        %1452 = vmatprep.subr.bf16.mxu0 0
        %1453 = vmatpush1.bf16.msra.mxu0 0
        %1454 = vmatprep.subr.bf16.mxu0 0
        %1455 = vmatpush1.bf16.msra.mxu0 0
        %1456 = vmatprep.subr.bf16.mxu0 0
        %1457 = vmatpush1.bf16.msra.mxu0 0
        %1458 = vmatprep.subr.bf16.mxu0 0
        %1459 = vmatpush1.bf16.msra.mxu0 0
        %1460 = vmatprep.subr.bf16.mxu0 0
        %1461 = vmatpush1.bf16.msra.mxu0 0
        %1462 = vmatprep.subr.bf16.mxu0 0
        %1463 = vmatpush1.bf16.msra.mxu0 0
        %1464 = vmatprep.subr.bf16.mxu0 0
        %1465 = vmatpush1.bf16.msra.mxu0 0
        %1466 = vmatprep.subr.bf16.mxu0 0
        %1467 = vmatpush1.bf16.msra.mxu0 0
        %1468 = vmatprep.subr.bf16.mxu0 0
        %1469 = vmatpush1.bf16.msra.mxu0 0
        %1470 = vmatprep.subr.bf16.mxu0 0
        %1471 = vmatpush1.bf16.msra.mxu0 0
        %1472 = vmatprep.subr.bf16.mxu0 0
        %1473 = vmatpush1.bf16.msra.mxu0 0
        %1474 = vmatprep.mubr.bf16.mxu0 0
        %1475 = vmatmul.mubr.bf16.gmra.mrb[0].mxu0 %v1440
        %v1476 = vpop.f32.mrb[0].mxu0
        %v1477 = vadd.f32 0.0, %v1476
        %v1478 = vpop.f32.mrb[0].mxu0
        %v1479 = vpop.f32.mrb[0].mxu0
        %v1480 = vadd.f32 0.0, %v1479
        %v1481 = vpop.f32.mrb[0].mxu0
        %1482 = vdwg.mxu0
        %1485 = vrot.lane.b32.xlu0 %v1235, 32
        %v1486 = vpop.permute.xlu0 %1485
        %1487 = vrot.lane.b32.xlu0 %v1238, 32
        %v1488 = vpop.permute.xlu0 %1487
        %1493 = vrot.lane.b32.xlu0 %v1356, 64
        %v1494 = vpop.permute.xlu0 %1493
        %1495 = vrot.lane.b32.xlu0 %v1359, 64
        %v1496 = vpop.permute.xlu0 %1495
        %1501 = vrot.lane.b32.xlu0 %v1477, 96
        %v1502 = vpop.permute.xlu0 %1501
        %1503 = vrot.lane.b32.xlu0 %v1480, 96
        %v1504 = vpop.permute.xlu0 %1503
        %v1507 = vsel %vm1001, %v1111, %v1486
        %v1508 = vsel %vm1001, %v1114, %v1488
        %vm1509 = vcmask 523264
        %v1510 = vsel %vm1509, %v1507, %v1494
        %v1511 = vsel %vm1509, %v1508, %v1496
        %vm1512 = vcmask 785408
        %v1513 = vsel %vm1512, %v1510, %v1502
        %v1514 = vsel %vm1512, %v1511, %v1504
        %v1515 = vpack.c.bf16 %v1514, %v1513
        %v1516 = vld [vmem:[%s576] sm:$0xf]
        %v1517 = vld [vmem:[%s576 + $0x4] sm:$0xf]
        %v1518 = vld [vmem:[%s576 + $0x8] sm:$0xf]
        %v1519 = vld [vmem:[%s576 + $0xc] sm:$0xf]
        %v1520 = vld [vmem:[%s576 + $0x10] sm:$0xf]
        %v1521 = vld [vmem:[%s576 + $0x14] sm:$0xf]
        %v1522 = vld [vmem:[%s576 + $0x18] sm:$0xf]
        %v1523 = vld [vmem:[%s576 + $0x1c] sm:$0xf]
        %v1524 = vld [vmem:[%s576 + $0x20] sm:$0xf]
        %v1525 = vld [vmem:[%s576 + $0x24] sm:$0xf]
        %v1526 = vld [vmem:[%s576 + $0x28] sm:$0xf]
        %v1527 = vld [vmem:[%s576 + $0x2c] sm:$0xf]
        %v1528 = vld [vmem:[%s576 + $0x30] sm:$0xf]
        %v1529 = vld [vmem:[%s576 + $0x34] sm:$0xf]
        %v1530 = vld [vmem:[%s576 + $0x38] sm:$0xf]
        %v1531 = vld [vmem:[%s576 + $0x3c] sm:$0xf]
        %v1532 = vld [vmem:[%s685] sm:$0x1]
        %v1534 = vlaneseq
        %v1535 = vshrl.u32 %v1534, 7
        %v1536 = vsub.s32 0, %v1535
        %v1537 = vrot.slane %v1532, %v1536
        %v1555 = vunpack.c.l.b16 %v1516
        %v1556 = vunpack.c.l.b16 %v1517
        %v1557 = vunpack.c.l.b16 %v1518
        %v1558 = vunpack.c.l.b16 %v1519
        %v1559 = vunpack.c.l.b16 %v1520
        %v1560 = vunpack.c.l.b16 %v1521
        %v1561 = vunpack.c.l.b16 %v1522
        %v1562 = vunpack.c.l.b16 %v1523
        %v1563 = vunpack.c.l.b16 %v1524
        %v1564 = vunpack.c.l.b16 %v1525
        %v1565 = vunpack.c.l.b16 %v1526
        %v1566 = vunpack.c.l.b16 %v1527
        %v1567 = vunpack.c.l.b16 %v1528
        %v1568 = vunpack.c.l.b16 %v1529
        %v1569 = vunpack.c.l.b16 %v1530
        %v1570 = vunpack.c.l.b16 %v1531
        %v1571 = vpack.c.b16 %v1556, %v1555
        %v1572 = vpack.c.b16 %v1558, %v1557
        %v1573 = vpack.c.b16 %v1560, %v1559
        %v1574 = vpack.c.b16 %v1562, %v1561
        %v1575 = vpack.c.b16 %v1564, %v1563
        %v1576 = vpack.c.b16 %v1566, %v1565
        %v1577 = vpack.c.b16 %v1568, %v1567
        %v1578 = vpack.c.b16 %v1570, %v1569
        %1587 = vmatprep.subr.bf16.mxu0 0
        %1588 = vmatpush1.bf16.msra.mxu0 %v1571
        %1589 = vmatprep.subr.bf16.mxu0 0
        %1590 = vmatpush1.bf16.msra.mxu0 %v1572
        %1591 = vmatprep.subr.bf16.mxu0 0
        %1592 = vmatpush1.bf16.msra.mxu0 %v1573
        %1593 = vmatprep.subr.bf16.mxu0 0
        %1594 = vmatpush1.bf16.msra.mxu0 %v1574
        %1595 = vmatprep.subr.bf16.mxu0 0
        %1596 = vmatpush1.bf16.msra.mxu0 %v1575
        %1597 = vmatprep.subr.bf16.mxu0 0
        %1598 = vmatpush1.bf16.msra.mxu0 %v1576
        %1599 = vmatprep.subr.bf16.mxu0 0
        %1600 = vmatpush1.bf16.msra.mxu0 %v1577
        %1601 = vmatprep.subr.bf16.mxu0 0
        %1602 = vmatpush1.bf16.msra.mxu0 %v1578
        %1603 = vmatprep.subr.bf16.mxu0 0
        %1604 = vmatpush1.bf16.msra.mxu0 0
        %1605 = vmatprep.subr.bf16.mxu0 0
        %1606 = vmatpush1.bf16.msra.mxu0 0
        %1607 = vmatprep.subr.bf16.mxu0 0
        %1608 = vmatpush1.bf16.msra.mxu0 0
        %1609 = vmatprep.subr.bf16.mxu0 0
        %1610 = vmatpush1.bf16.msra.mxu0 0
        %1611 = vmatprep.subr.bf16.mxu0 0
        %1612 = vmatpush1.bf16.msra.mxu0 0
        %1613 = vmatprep.subr.bf16.mxu0 0
        %1614 = vmatpush1.bf16.msra.mxu0 0
        %1615 = vmatprep.subr.bf16.mxu0 0
        %1616 = vmatpush1.bf16.msra.mxu0 0
        %1617 = vmatprep.subr.bf16.mxu0 0
        %1618 = vmatpush1.bf16.msra.mxu0 0
        %1619 = vmatprep.mubr.bf16.mxu0 0
        %1620 = vmatmul.mubr.bf16.gmra.mrb[0].mxu0 %v1515
        %v1621 = vpop.f32.mrb[0].mxu0
        %v1622 = vadd.f32 %v1537, %v1621
        %v1623 = vpop.f32.mrb[0].mxu0
        %v1624 = vpop.f32.mrb[0].mxu0
        %v1625 = vadd.f32 %v1537, %v1624
        %v1626 = vpop.f32.mrb[0].mxu0
        %1627 = vdwg.mxu0
        %v1628 = vadd.f32 %v708, %v1622
        %v1629 = vadd.f32 %v709, %v1625
        %v1630 = vld [vmem:[%s688] sm:$0x1]
        %v1631 = vld [vmem:[%s691] sm:$0x1]
        %1632 = vadd.xlane.f32.xlu0 %v1628
        %v1633 = vpop.xlane.xlu0 %1632
        %1634 = vadd.xlane.f32.xlu0 %v1629
        %v1635 = vpop.xlane.xlu0 %1634
        %v1636 = vmul.f32 %v1633, %v716
        %v1637 = vmul.f32 %v1635, %v716
        %v1638 = vsub.f32 %v1628, %v1636
        %v1639 = vsub.f32 %v1629, %v1637
        %v1640 = vmul.f32 %v1638, %v1638
        %v1641 = vmul.f32 %v1639, %v1639
        %1642 = vadd.xlane.f32.xlu0 %v1640
        %v1643 = vpop.xlane.xlu0 %1642
        %1644 = vadd.xlane.f32.xlu0 %v1641
        %v1645 = vpop.xlane.xlu0 %1644
        %v1646 = vmul.f32 %v1643, %v716
        %v1647 = vmul.f32 %v1645, %v716
        %v1648 = vadd.f32 %v1646, 1e-05
        %v1649 = vadd.f32 %v1647, 1e-05
        %v1650 = vrsqrt.pop %v1648
        %v1651 = vrsqrt.pop %v1649
        %v1652 = vmul.f32 %v1638, %v1650
        %v1653 = vmul.f32 %v1639, %v1651
        %v1655 = vlaneseq
        %v1656 = vshrl.u32 %v1655, 7
        %v1657 = vsub.s32 0, %v1656
        %v1658 = vrot.slane %v1630, %v1657
        %v1660 = vmul.f32 %v1652, %v1658
        %v1661 = vmul.f32 %v1653, %v1658
        %v1663 = vlaneseq
        %v1664 = vshrl.u32 %v1663, 7
        %v1665 = vsub.s32 0, %v1664
        %v1666 = vrot.slane %v1631, %v1665
        %v1668 = vadd.f32 %v1660, %v1666
        %v1669 = vadd.f32 %v1661, %v1666
        %v1670 = vpack.c.bf16 %v1669, %v1668
        %v1671 = vld [vmem:[%s585] sm:$0xff]
        %v1672 = vld [vmem:[%s585 + $0x8] sm:$0xff]
        %v1673 = vld [vmem:[%s585 + $0x10] sm:$0xff]
        %v1674 = vld [vmem:[%s585 + $0x18] sm:$0xff]
        %v1675 = vld [vmem:[%s585 + $0x20] sm:$0xff]
        %v1676 = vld [vmem:[%s585 + $0x28] sm:$0xff]
        %v1677 = vld [vmem:[%s585 + $0x30] sm:$0xff]
        %v1678 = vld [vmem:[%s585 + $0x38] sm:$0xff]
        %v1679 = vld [vmem:[%s585 + $0x40] sm:$0xff]
        %v1680 = vld [vmem:[%s585 + $0x48] sm:$0xff]
        %v1681 = vld [vmem:[%s585 + $0x50] sm:$0xff]
        %v1682 = vld [vmem:[%s585 + $0x58] sm:$0xff]
        %v1683 = vld [vmem:[%s585 + $0x60] sm:$0xff]
        %v1684 = vld [vmem:[%s585 + $0x68] sm:$0xff]
        %v1685 = vld [vmem:[%s585 + $0x70] sm:$0xff]
        %v1686 = vld [vmem:[%s585 + $0x78] sm:$0xff]
        %v1687 = vld [vmem:[%s695] sm:$0x3]
        %v1689 = vlaneseq
        %v1690 = vshrl.u32 %v1689, 7
        %v1691 = vsub.s32 0, %v1690
        %v1692 = vrot.slane %v1687, %v1691
        %v1693 = vlaneseq
        %v1694 = vshrl.u32 %v1693, 7
        %v1695 = vsub.s32 1, %v1694
        %v1696 = vrot.slane %v1687, %v1695
        %v1715 = vunpack.c.l.b16 %v1671
        %v1716 = vunpack.c.h.b16 %v1671
        %v1717 = vunpack.c.l.b16 %v1672
        %v1718 = vunpack.c.h.b16 %v1672
        %v1719 = vunpack.c.l.b16 %v1673
        %v1720 = vunpack.c.h.b16 %v1673
        %v1721 = vunpack.c.l.b16 %v1674
        %v1722 = vunpack.c.h.b16 %v1674
        %v1723 = vunpack.c.l.b16 %v1675
        %v1724 = vunpack.c.h.b16 %v1675
        %v1725 = vunpack.c.l.b16 %v1676
        %v1726 = vunpack.c.h.b16 %v1676
        %v1727 = vunpack.c.l.b16 %v1677
        %v1728 = vunpack.c.h.b16 %v1677
        %v1729 = vunpack.c.l.b16 %v1678
        %v1730 = vunpack.c.h.b16 %v1678
        %v1731 = vunpack.c.l.b16 %v1679
        %v1732 = vunpack.c.h.b16 %v1679
        %v1733 = vunpack.c.l.b16 %v1680
        %v1734 = vunpack.c.h.b16 %v1680
        %v1735 = vunpack.c.l.b16 %v1681
        %v1736 = vunpack.c.h.b16 %v1681
        %v1737 = vunpack.c.l.b16 %v1682
        %v1738 = vunpack.c.h.b16 %v1682
        %v1739 = vunpack.c.l.b16 %v1683
        %v1740 = vunpack.c.h.b16 %v1683
        %v1741 = vunpack.c.l.b16 %v1684
        %v1742 = vunpack.c.h.b16 %v1684
        %v1743 = vunpack.c.l.b16 %v1685
        %v1744 = vunpack.c.h.b16 %v1685
        %v1745 = vunpack.c.l.b16 %v1686
        %v1746 = vunpack.c.h.b16 %v1686
        %v1747 = vpack.c.b16 %v1717, %v1715
        %v1748 = vpack.c.b16 %v1718, %v1716
        %v1749 = vpack.c.b16 %v1721, %v1719
        %v1750 = vpack.c.b16 %v1722, %v1720
        %v1751 = vpack.c.b16 %v1725, %v1723
        %v1752 = vpack.c.b16 %v1726, %v1724
        %v1753 = vpack.c.b16 %v1729, %v1727
        %v1754 = vpack.c.b16 %v1730, %v1728
        %v1755 = vpack.c.b16 %v1733, %v1731
        %v1756 = vpack.c.b16 %v1734, %v1732
        %v1757 = vpack.c.b16 %v1737, %v1735
        %v1758 = vpack.c.b16 %v1738, %v1736
        %v1759 = vpack.c.b16 %v1741, %v1739
        %v1760 = vpack.c.b16 %v1742, %v1740
        %v1761 = vpack.c.b16 %v1745, %v1743
        %v1762 = vpack.c.b16 %v1746, %v1744
        %1779 = vmatprep.subr.bf16.mxu0 %v1748
        %1780 = vmatpush1.bf16.msra.mxu0 %v1747
        %1781 = vmatprep.subr.bf16.mxu0 %v1750
        %1782 = vmatpush1.bf16.msra.mxu0 %v1749
        %1783 = vmatprep.subr.bf16.mxu0 %v1752
        %1784 = vmatpush1.bf16.msra.mxu0 %v1751
        %1785 = vmatprep.subr.bf16.mxu0 %v1754
        %1786 = vmatpush1.bf16.msra.mxu0 %v1753
        %1787 = vmatprep.subr.bf16.mxu0 %v1756
        %1788 = vmatpush1.bf16.msra.mxu0 %v1755
        %1789 = vmatprep.subr.bf16.mxu0 %v1758
        %1790 = vmatpush1.bf16.msra.mxu0 %v1757
        %1791 = vmatprep.subr.bf16.mxu0 %v1760
        %1792 = vmatpush1.bf16.msra.mxu0 %v1759
        %1793 = vmatprep.subr.bf16.mxu0 %v1762
        %1794 = vmatpush1.bf16.msra.mxu0 %v1761
        %1795 = vmatprep.subr.bf16.mxu0 0
        %1796 = vmatpush1.bf16.msra.mxu0 0
        %1797 = vmatprep.subr.bf16.mxu0 0
        %1798 = vmatpush1.bf16.msra.mxu0 0
        %1799 = vmatprep.subr.bf16.mxu0 0
        %1800 = vmatpush1.bf16.msra.mxu0 0
        %1801 = vmatprep.subr.bf16.mxu0 0
        %1802 = vmatpush1.bf16.msra.mxu0 0
        %1803 = vmatprep.subr.bf16.mxu0 0
        %1804 = vmatpush1.bf16.msra.mxu0 0
        %1805 = vmatprep.subr.bf16.mxu0 0
        %1806 = vmatpush1.bf16.msra.mxu0 0
        %1807 = vmatprep.subr.bf16.mxu0 0
        %1808 = vmatpush1.bf16.msra.mxu0 0
        %1809 = vmatprep.subr.bf16.mxu0 0
        %1810 = vmatpush1.bf16.msra.mxu0 0
        %1811 = vmatprep.mubr.bf16.mxu0 0
        %1812 = vmatmul.mubr.bf16.gmra.mrb[0].mxu0 %v1670
        %v1813 = vpop.f32.mrb[0].mxu0
        %v1814 = vadd.f32 %v1692, %v1813
        %v1815 = vpop.f32.mrb[0].mxu0
        %v1816 = vadd.f32 %v1696, %v1815
        %v1817 = vpop.f32.mrb[0].mxu0
        %v1818 = vadd.f32 %v1692, %v1817
        %v1819 = vpop.f32.mrb[0].mxu0
        %v1820 = vadd.f32 %v1696, %v1819
        %1821 = vdwg.mxu0
        %v1822 = vmax.f32 %v1814, 0.0
        %v1823 = vmax.f32 %v1816, 0.0
        %v1824 = vmax.f32 %v1818, 0.0
        %v1825 = vmax.f32 %v1820, 0.0
        %v1826 = vpack.c.bf16 %v1824, %v1822
        %v1827 = vpack.c.bf16 %v1825, %v1823
        %v1828 = vld [vmem:[%s594] sm:$0xf]
        %v1829 = vld [vmem:[%s594 + $0x4] sm:$0xf]
        %v1830 = vld [vmem:[%s594 + $0x8] sm:$0xf]
        %v1831 = vld [vmem:[%s594 + $0xc] sm:$0xf]
        %v1832 = vld [vmem:[%s594 + $0x10] sm:$0xf]
        %v1833 = vld [vmem:[%s594 + $0x14] sm:$0xf]
        %v1834 = vld [vmem:[%s594 + $0x18] sm:$0xf]
        %v1835 = vld [vmem:[%s594 + $0x1c] sm:$0xf]
        %v1836 = vld [vmem:[%s594 + $0x20] sm:$0xf]
        %v1837 = vld [vmem:[%s594 + $0x24] sm:$0xf]
        %v1838 = vld [vmem:[%s594 + $0x28] sm:$0xf]
        %v1839 = vld [vmem:[%s594 + $0x2c] sm:$0xf]
        %v1840 = vld [vmem:[%s594 + $0x30] sm:$0xf]
        %v1841 = vld [vmem:[%s594 + $0x34] sm:$0xf]
        %v1842 = vld [vmem:[%s594 + $0x38] sm:$0xf]
        %v1843 = vld [vmem:[%s594 + $0x3c] sm:$0xf]
        %v1844 = vld [vmem:[%s594 + $0x40] sm:$0xf]
        %v1845 = vld [vmem:[%s594 + $0x44] sm:$0xf]
        %v1846 = vld [vmem:[%s594 + $0x48] sm:$0xf]
        %v1847 = vld [vmem:[%s594 + $0x4c] sm:$0xf]
        %v1848 = vld [vmem:[%s594 + $0x50] sm:$0xf]
        %v1849 = vld [vmem:[%s594 + $0x54] sm:$0xf]
        %v1850 = vld [vmem:[%s594 + $0x58] sm:$0xf]
        %v1851 = vld [vmem:[%s594 + $0x5c] sm:$0xf]
        %v1852 = vld [vmem:[%s594 + $0x60] sm:$0xf]
        %v1853 = vld [vmem:[%s594 + $0x64] sm:$0xf]
        %v1854 = vld [vmem:[%s594 + $0x68] sm:$0xf]
        %v1855 = vld [vmem:[%s594 + $0x6c] sm:$0xf]
        %v1856 = vld [vmem:[%s594 + $0x70] sm:$0xf]
        %v1857 = vld [vmem:[%s594 + $0x74] sm:$0xf]
        %v1858 = vld [vmem:[%s594 + $0x78] sm:$0xf]
        %v1859 = vld [vmem:[%s594 + $0x7c] sm:$0xf]
        %v1860 = vld [vmem:[%s698] sm:$0x1]
        %v1862 = vlaneseq
        %v1863 = vshrl.u32 %v1862, 7
        %v1864 = vsub.s32 0, %v1863
        %v1865 = vrot.slane %v1860, %v1864
        %v1899 = vunpack.c.l.b16 %v1828
        %v1900 = vunpack.c.l.b16 %v1829
        %v1901 = vunpack.c.l.b16 %v1830
        %v1902 = vunpack.c.l.b16 %v1831
        %v1903 = vunpack.c.l.b16 %v1832
        %v1904 = vunpack.c.l.b16 %v1833
        %v1905 = vunpack.c.l.b16 %v1834
        %v1906 = vunpack.c.l.b16 %v1835
        %v1907 = vunpack.c.l.b16 %v1836
        %v1908 = vunpack.c.l.b16 %v1837
        %v1909 = vunpack.c.l.b16 %v1838
        %v1910 = vunpack.c.l.b16 %v1839
        %v1911 = vunpack.c.l.b16 %v1840
        %v1912 = vunpack.c.l.b16 %v1841
        %v1913 = vunpack.c.l.b16 %v1842
        %v1914 = vunpack.c.l.b16 %v1843
        %v1915 = vunpack.c.l.b16 %v1844
        %v1916 = vunpack.c.l.b16 %v1845
        %v1917 = vunpack.c.l.b16 %v1846
        %v1918 = vunpack.c.l.b16 %v1847
        %v1919 = vunpack.c.l.b16 %v1848
        %v1920 = vunpack.c.l.b16 %v1849
        %v1921 = vunpack.c.l.b16 %v1850
        %v1922 = vunpack.c.l.b16 %v1851
        %v1923 = vunpack.c.l.b16 %v1852
        %v1924 = vunpack.c.l.b16 %v1853
        %v1925 = vunpack.c.l.b16 %v1854
        %v1926 = vunpack.c.l.b16 %v1855
        %v1927 = vunpack.c.l.b16 %v1856
        %v1928 = vunpack.c.l.b16 %v1857
        %v1929 = vunpack.c.l.b16 %v1858
        %v1930 = vunpack.c.l.b16 %v1859
        %v1931 = vpack.c.b16 %v1900, %v1899
        %v1932 = vpack.c.b16 %v1902, %v1901
        %v1933 = vpack.c.b16 %v1904, %v1903
        %v1934 = vpack.c.b16 %v1906, %v1905
        %v1935 = vpack.c.b16 %v1908, %v1907
        %v1936 = vpack.c.b16 %v1910, %v1909
        %v1937 = vpack.c.b16 %v1912, %v1911
        %v1938 = vpack.c.b16 %v1914, %v1913
        %v1939 = vpack.c.b16 %v1916, %v1915
        %v1940 = vpack.c.b16 %v1918, %v1917
        %v1941 = vpack.c.b16 %v1920, %v1919
        %v1942 = vpack.c.b16 %v1922, %v1921
        %v1943 = vpack.c.b16 %v1924, %v1923
        %v1944 = vpack.c.b16 %v1926, %v1925
        %v1945 = vpack.c.b16 %v1928, %v1927
        %v1946 = vpack.c.b16 %v1930, %v1929
        %1963 = vmatprep.subr.bf16.mxu0 0
        %1964 = vmatpush1.bf16.msra.mxu0 %v1931
        %1965 = vmatprep.subr.bf16.mxu0 0
        %1966 = vmatpush1.bf16.msra.mxu0 %v1932
        %1967 = vmatprep.subr.bf16.mxu0 0
        %1968 = vmatpush1.bf16.msra.mxu0 %v1933
        %1969 = vmatprep.subr.bf16.mxu0 0
        %1970 = vmatpush1.bf16.msra.mxu0 %v1934
        %1971 = vmatprep.subr.bf16.mxu0 0
        %1972 = vmatpush1.bf16.msra.mxu0 %v1935
        %1973 = vmatprep.subr.bf16.mxu0 0
        %1974 = vmatpush1.bf16.msra.mxu0 %v1936
        %1975 = vmatprep.subr.bf16.mxu0 0
        %1976 = vmatpush1.bf16.msra.mxu0 %v1937
        %1977 = vmatprep.subr.bf16.mxu0 0
        %1978 = vmatpush1.bf16.msra.mxu0 %v1938
        %1979 = vmatprep.subr.bf16.mxu0 0
        %1980 = vmatpush1.bf16.msra.mxu0 %v1939
        %1981 = vmatprep.subr.bf16.mxu0 0
        %1982 = vmatpush1.bf16.msra.mxu0 %v1940
        %1983 = vmatprep.subr.bf16.mxu0 0
        %1984 = vmatpush1.bf16.msra.mxu0 %v1941
        %1985 = vmatprep.subr.bf16.mxu0 0
        %1986 = vmatpush1.bf16.msra.mxu0 %v1942
        %1987 = vmatprep.subr.bf16.mxu0 0
        %1988 = vmatpush1.bf16.msra.mxu0 %v1943
        %1989 = vmatprep.subr.bf16.mxu0 0
        %1990 = vmatpush1.bf16.msra.mxu0 %v1944
        %1991 = vmatprep.subr.bf16.mxu0 0
        %1992 = vmatpush1.bf16.msra.mxu0 %v1945
        %1993 = vmatprep.subr.bf16.mxu0 0
        %1994 = vmatpush1.bf16.msra.mxu0 %v1946
        %1995 = vmatprep.mubr.bf16.mxu0 %v1827
        %1996 = vmatmul.mubr.bf16.gmra.mrb[0].mxu0 %v1826
        %v1997 = vpop.f32.mrb[0].mxu0
        %v1998 = vadd.f32 %v1865, %v1997
        %v1999 = vpop.f32.mrb[0].mxu0
        %v2000 = vpop.f32.mrb[0].mxu0
        %v2001 = vadd.f32 %v1865, %v2000
        %v2002 = vpop.f32.mrb[0].mxu0
        %2003 = vdwg.mxu0
        %v2004 = vadd.f32 %v1628, %v1998
        %v2005 = vadd.f32 %v1629, %v2001
        %2006 = vst [vmem:[%s676] sm:$0xff] %v2004
        %2007 = vst [vmem:[%s676 + $0x8] sm:$0xff] %v2005
        %s2008 = sand.u32 %s367, 1
        %s2009 = scalar_lea.sflag [#allocation4], %s2008
        %s2010 = sand.u32 %s367, 1
        %s2011 = smul.addr %s2010, 16
        %s2012 = scalar_lea.vmem [#allocation11], %s2011
        // Predicated region
        $region93: #{transformer_forward.1} parent=67 // pred_check
          %p2013 = pneg %p377
        $region94: #{transformer_forward.1} parent=67 // pred_check_branch
          %2015 = sbr.rel (%p2013) target = $region96
        $region95: #{transformer_forward.1} parent=67 // pred_region
          %s2017 = ssub.s32 256, 256
          %2018 = vsyncadd %s2009, %s2017
          %s2019 = smul.addr %s39, 2
          %s2020 = smul.addr %s2019, 128
          %s2021 = scalar_lea.hbm %s12, %s2020
          %s2022 = sshll.u32 %s2012, 4
          %s2023 = int_to_ptr.vmem [resolvable:$true] %s2022
          %2028 = dma.vmem_to_hbm [thread:$0]  %s2023, 256, %s2021, %s2009, 128, 128, 8
        $region96: #{transformer_forward.1} parent=67 // pred_fallthru
          _
      $region68: #{transformer_forward.1} parent=5 // pred_fallthru
        _
      %p2029 = scmp.le.s32.totalorder 2, %s30
      // Predicated region
      $region97: #{transformer_forward.1} parent=5 // pred_check
        %p2030 = pneg %p2029
      $region98: #{transformer_forward.1} parent=5 // pred_check_branch
        %2032 = sbr.rel (%p2030) target = $region100
      $region99: #{transformer_forward.1} parent=5 // pred_region
        %s2033 = ssub.s32 %s30, 2
        // Predicated region
        $region101: #{transformer_forward.1} parent=99 // pred_check
          %p2034 = pneg %p383
        $region102: #{transformer_forward.1} parent=99 // pred_check_branch
          %2036 = sbr.rel (%p2034) target = $region104
        $region103: #{transformer_forward.1} parent=99 // pred_region
          %s2037 = sand.u32 %s368, 1
          %s2038 = scalar_lea.sflag [#allocation4], %s2037
          %s2039 = sand.u32 %s368, 1
          %s2040 = smul.addr %s2039, 16
          %s2041 = scalar_lea.vmem [#allocation11], %s2040
          %2042 = dma.done %s2038, 256
        $region104: #{transformer_forward.1} parent=99 // pred_fallthru
          _
      $region100: #{transformer_forward.1} parent=5 // pred_fallthru
        _
    $region6: #{transformer_forward.1} parent=1 // loop_footer
      %s34 = sadd.s32 1, %s30
    $region7: #{transformer_forward.1} parent=1 // loop_footer_branch
      %29 = sbr.rel target = $region3
    $region8: #{transformer_forward.1} parent=1 // loop_exit
      _
    %2043 = vsyncpa [#allocation3], 1
    %s2044 = scalar_lea.sflag [#allocation3], 1
    %2045 = vsyncpa %s2044, 1
    %2046 = vsyncpa [#allocation6], 1
    %s2047 = scalar_lea.sflag [#allocation6], 1
    %2048 = vsyncpa %s2047, 1
    %2049 = vsyncpa [#allocation9], 1
    %s2050 = scalar_lea.sflag [#allocation9], 1
    %2051 = vsyncpa %s2050, 1
    %2052 = vsyncpa [#allocation4], 1
    %s2053 = scalar_lea.sflag [#allocation4], 1
    %2054 = vsyncpa %s2053, 1

</llo_original>
